<compile_context>
chip_gen: v7x
topology: tpu7x:2x2x1
jax: 0.10.0
libtpu: 0.0.40
codegen_flags: <defaults>
</compile_context>

<pallas_src>
import math
import functools

import jax
import jax.numpy as jnp
from jax.experimental import pallas as pl
from jax.experimental.pallas import tpu as pltpu


NEG = -10000.0


def _round_up(x, m):
    return ((x + m - 1) // m) * m


def _nbytes(shape, dtype):
    return math.prod(shape) * jnp.dtype(dtype).itemsize


def _vmem_limit(block_bytes):
    # double-buffered pipeline blocks + headroom, capped below v7x's 64 MiB.
    return int(min(max(2 * block_bytes + (4 << 20), 8 << 20), 56 << 20))


# --------------------------- in-kernel helpers ------------------------------

def _dense(x_f32, w_bf16, b_f32):
    """x @ w + b with bf16 MXU inputs and f32 accumulation."""
    return jnp.dot(x_f32.astype(jnp.bfloat16), w_bf16,
                   preferred_element_type=jnp.float32) + b_f32


def _layer_norm(x, g, b, eps=1e-5):
    mean = jnp.mean(x, axis=-1, keepdims=True)
    var = jnp.mean((x - mean) ** 2, axis=-1, keepdims=True)
    return (x - mean) * jax.lax.rsqrt(var + eps) * g + b


def _mha(q2d, k2d, v2d, wo_t, bo, add_mask, *, H, Dh):
    """Multi-head attention for one batch element, batched over heads.

    q2d:(Lq,H*Dh)  k2d/v2d:(Lk,H*Dh)  f32 values; wo_t:(D,D) bf16; bo:(1,D)
    f32; add_mask: additive f32 mask, (Lq,Lk) or (1,Lk), shared across heads.
    """
    Lq = q2d.shape[0]
    Lk = k2d.shape[0]
    scale = 1.0 / math.sqrt(Dh)
    # head split: (L, H*Dh) -> (H, L, Dh) via lane-layout-aware einshape
    q = pltpu.einshape("mhd->hmd", q2d.reshape(Lq, H, Dh))
    k = pltpu.einshape("mhd->hmd", k2d.reshape(Lk, H, Dh))
    v = pltpu.einshape("mhd->hmd", v2d.reshape(Lk, H, Dh))
    # one head-batched contraction for the scores
    s = jnp.einsum('hqd,hkd->hqk', q.astype(jnp.bfloat16),
                   k.astype(jnp.bfloat16),
                   preferred_element_type=jnp.float32)
    s = s * scale + add_mask[None]
    s_max = jnp.max(s, axis=-1, keepdims=True)
    p = jnp.exp(s - s_max)
    p = p * pl.reciprocal(jnp.sum(p, axis=-1, keepdims=True), approx=True)
    # one head-batched contraction for the context
    ctx = jnp.einsum('hqk,hkd->hqd', p.astype(jnp.bfloat16),
                     v.astype(jnp.bfloat16),
                     preferred_element_type=jnp.float32)
    ctx2d = pltpu.einshape("hmd->mhd", ctx).reshape(Lq, H * Dh)
    return jnp.dot(ctx2d.astype(jnp.bfloat16), wo_t,
                   preferred_element_type=jnp.float32) + bo


def _causal_pad_mask(tgt_add_row, t_real):
    """Decoder self-attn additive mask (Tp, Tp), built in-kernel.

    tgt_add_row: (1, Tp) f32, -10000 where the key is a pad token (incl. the
    sublane-padding extension).  Reproduces the reference's fully-masked-row
    reset (row -> 0 over the *real* key positions only).
    """
    Tp = tgt_add_row.shape[-1]
    row = jax.lax.broadcasted_iota(jnp.int32, (Tp, Tp), 0)
    col = jax.lax.broadcasted_iota(jnp.int32, (Tp, Tp), 1)
    masked = (col > row) | (tgt_add_row < -1.0)
    base = jnp.where(masked, jnp.float32(NEG), jnp.float32(0.0))
    full = jnp.max(base, axis=-1, keepdims=True) < -1.0          # all masked
    reset = jnp.where(col < t_real, jnp.float32(0.0), jnp.float32(NEG))
    return jnp.where(full, reset, base)


# ------------------------------ fused kernels -------------------------------

_ENC_KEYS = ('wqkv', 'bqkv', 'wo', 'bo', 'g1', 'bn1',
             'w1', 'bf1', 'w2', 'bf2', 'g2', 'bn2')

_DEC_KEYS = ('wqkv', 'bqkv', 'wo', 'bo', 'g1', 'bn1',
             'wq_c', 'bq_c', 'wkv_c', 'bkv_c', 'wo_c', 'bo_c', 'g2', 'bn2',
             'w1', 'bf1', 'w2', 'bf2', 'g3', 'bn3')


def _encoder_stack_kernel(x_ref, smask_ref, *refs, H, Dh):
    (wqkv, bqkv, wo, bo, g1, bn1,
     w1, bf1, w2, bf2, g2, bn2, out_ref) = refs
    layer = pl.program_id(1)

    @pl.when(layer == 0)
    def _():
        out_ref[...] = x_ref[...]          # seed the per-batch carried block

    D = H * Dh
    x = out_ref[...]                       # (Sp, D) f32, VMEM-resident carry
    qkv = _dense(x, wqkv[...], bqkv[...])  # fused Q/K/V projection (Sp, 3D)
    attn = _mha(qkv[:, :D], qkv[:, D:2 * D], qkv[:, 2 * D:],
                wo[...], bo[...], smask_ref[...], H=H, Dh=Dh)
    x = _layer_norm(x + attn, g1[...], bn1[...])
    ff = _dense(jnp.maximum(_dense(x, w1[...], bf1[...]), 0.0),
                w2[...], bf2[...])
    out_ref[...] = _layer_norm(x + ff, g2[...], bn2[...])


def _decoder_stack_kernel(x_ref, mem_ref, smask_ref, tmask_ref, *refs,
                          H, Dh, t_real):
    (wqkv, bqkv, wo_s, bo_s, g1, bn1,
     wq_c, bq_c, wkv_c, bkv_c, wo_c, bo_c, g2, bn2,
     w1, bf1, w2, bf2, g3, bn3, out_ref) = refs
    layer = pl.program_id(1)

    @pl.when(layer == 0)
    def _():
        out_ref[...] = x_ref[...]          # seed the per-batch carried block

    D = H * Dh
    x = out_ref[...]                       # (Tp, D) f32, VMEM-resident carry
    # masked self-attention (causal | pad mask built in-kernel, O(Tp^2) VPU)
    self_mask = _causal_pad_mask(tmask_ref[...], t_real)
    qkv = _dense(x, wqkv[...], bqkv[...])
    attn = _mha(qkv[:, :D], qkv[:, D:2 * D], qkv[:, 2 * D:],
                wo_s[...], bo_s[...], self_mask, H=H, Dh=Dh)
    x = _layer_norm(x + attn, g1[...], bn1[...])
    # cross-attention over encoder memory (fused K/V projection)
    q = _dense(x, wq_c[...], bq_c[...])
    kv = _dense(mem_ref[...], wkv_c[...], bkv_c[...])
    attn = _mha(q, kv[:, :D], kv[:, D:],
                wo_c[...], bo_c[...], smask_ref[...], H=H, Dh=Dh)
    x = _layer_norm(x + attn, g2[...], bn2[...])
    # feed-forward
    ff = _dense(jnp.maximum(_dense(x, w1[...], bf1[...]), 0.0),
                w2[...], bf2[...])
    out_ref[...] = _layer_norm(x + ff, g3[...], bn3[...])


def _fc_out_kernel(x_ref, w_ref, b_ref, o_ref):
    o_ref[...] = _dense(x_ref[...], w_ref[...], b_ref[...])


# ------------------------------ call wrappers -------------------------------

def _batch_spec(shape):
    """(B, ...) array: one batch slice per grid b, layer-invariant."""
    nd = len(shape)
    return pl.BlockSpec((None,) + tuple(shape[1:]),
                        lambda b, l, _nd=nd: (b,) + (0,) * (_nd - 1))


def _layer_spec(shape):
    """(L, ...) stacked weights: one layer slice per grid l."""
    nd = len(shape)
    return pl.BlockSpec((None,) + tuple(shape[1:]),
                        lambda b, l, _nd=nd: (l,) + (0,) * (_nd - 1))


def _encoder_stack(x, src_add, enc, *, H, Dh):
    B, Sp, D = x.shape
    n_layers = enc['wqkv'].shape[0]
    kern = functools.partial(_encoder_stack_kernel, H=H, Dh=Dh)
    operands = [x, src_add] + [enc[k] for k in _ENC_KEYS]
    in_specs = ([_batch_spec(x.shape), _batch_spec(src_add.shape)]
                + [_layer_spec(enc[k].shape) for k in _ENC_KEYS])
    blk = (2 * _nbytes((Sp, D), jnp.float32) + _nbytes((1, Sp), jnp.float32)
           + sum(_nbytes(enc[k].shape[1:], enc[k].dtype) for k in _ENC_KEYS))
    return pl.pallas_call(
        kern,
        out_shape=jax.ShapeDtypeStruct((B, Sp, D), jnp.float32),
        grid=(B, n_layers),
        in_specs=in_specs,
        out_specs=_batch_spec((B, Sp, D)),
        input_output_aliases={0: 0},
        compiler_params=pltpu.CompilerParams(
            dimension_semantics=("parallel", "arbitrary"),
            vmem_limit_bytes=_vmem_limit(blk)),
    )(*operands)


def _decoder_stack(x, mem, src_add, tgt_add, dec, *, H, Dh, t_real):
    B, Tp, D = x.shape
    _, Sp, _ = mem.shape
    n_layers = dec['wqkv'].shape[0]
    kern = functools.partial(_decoder_stack_kernel, H=H, Dh=Dh, t_real=t_real)
    operands = [x, mem, src_add, tgt_add] + [dec[k] for k in _DEC_KEYS]
    in_specs = ([_batch_spec(a.shape) for a in (x, mem, src_add, tgt_add)]
                + [_layer_spec(dec[k].shape) for k in _DEC_KEYS])
    blk = (2 * _nbytes((Tp, D), jnp.float32) + _nbytes((Sp, D), jnp.float32)
           + _nbytes((1, Sp), jnp.float32) + _nbytes((1, Tp), jnp.float32)
           + sum(_nbytes(dec[k].shape[1:], dec[k].dtype) for k in _DEC_KEYS))
    return pl.pallas_call(
        kern,
        out_shape=jax.ShapeDtypeStruct((B, Tp, D), jnp.float32),
        grid=(B, n_layers),
        in_specs=in_specs,
        out_specs=_batch_spec((B, Tp, D)),
        input_output_aliases={0: 0},
        compiler_params=pltpu.CompilerParams(
            dimension_semantics=("parallel", "arbitrary"),
            vmem_limit_bytes=_vmem_limit(blk)),
    )(*operands)


def _fc_out(x2d, wout, bout):
    M, D = x2d.shape
    Vp = wout.shape[1]
    vblk = 256 if Vp % 256 == 0 else 128
    nv = Vp // vblk
    blk = (_nbytes((M, D), jnp.float32) + _nbytes((D, vblk), wout.dtype)
           + _nbytes((1, vblk), jnp.float32) + _nbytes((M, vblk), jnp.float32))
    return pl.pallas_call(
        _fc_out_kernel,
        out_shape=jax.ShapeDtypeStruct((M, Vp), jnp.float32),
        grid=(nv,),
        in_specs=[pl.BlockSpec((M, D), lambda j: (0, 0)),
                  pl.BlockSpec((D, vblk), lambda j: (0, j)),
                  pl.BlockSpec((1, vblk), lambda j: (0, j))],
        out_specs=pl.BlockSpec((M, vblk), lambda j: (0, j)),
        compiler_params=pltpu.CompilerParams(
            dimension_semantics=("parallel",),
            vmem_limit_bytes=_vmem_limit(blk)),
    )(x2d, wout, bout)


# ------------------------------ model wrapper -------------------------------

def sinusoidal_pe(max_len, d_model):
    position = jnp.arange(max_len, dtype=jnp.float32)[:, None]
    div_term = jnp.exp(jnp.arange(0, d_model, 2, dtype=jnp.float32)
                       * (-math.log(10000.0) / d_model))
    pe = jnp.zeros((max_len, d_model), jnp.float32)
    pe = pe.at[:, 0::2].set(jnp.sin(position * div_term))
    pe = pe.at[:, 1::2].set(jnp.cos(position * div_term))
    return pe


def prepare_params(params):
    """Fuse / pre-transpose / bf16-cast weights and stack them over layers."""
    D = params['embed'].shape[1]
    H = params['num_heads']

    def lin_t(w):                               # (out,in) f32 -> (in,out) bf16
        return jnp.asarray(w.T, dtype=jnp.bfloat16)

    def prep_enc(p):
        a = p['self_attn']
        return {
            'wqkv': lin_t(jnp.concatenate([a['wq_w'], a['wk_w'], a['wv_w']], 0)),
            'bqkv': jnp.concatenate([a['wq_b'], a['wk_b'], a['wv_b']])[None, :],
            'wo': lin_t(a['wo_w']), 'bo': a['wo_b'][None, :],
            'g1': p['norm1_g'][None, :], 'bn1': p['norm1_b'][None, :],
            'w1': lin_t(p['ff_w1']), 'bf1': p['ff_b1'][None, :],
            'w2': lin_t(p['ff_w2']), 'bf2': p['ff_b2'][None, :],
            'g2': p['norm2_g'][None, :], 'bn2': p['norm2_b'][None, :],
        }

    def prep_dec(p):
        a, c = p['self_attn'], p['cross_attn']
        return {
            'wqkv': lin_t(jnp.concatenate([a['wq_w'], a['wk_w'], a['wv_w']], 0)),
            'bqkv': jnp.concatenate([a['wq_b'], a['wk_b'], a['wv_b']])[None, :],
            'wo': lin_t(a['wo_w']), 'bo': a['wo_b'][None, :],
            'g1': p['norm1_g'][None, :], 'bn1': p['norm1_b'][None, :],
            'wq_c': lin_t(c['wq_w']), 'bq_c': c['wq_b'][None, :],
            'wkv_c': lin_t(jnp.concatenate([c['wk_w'], c['wv_w']], 0)),
            'bkv_c': jnp.concatenate([c['wk_b'], c['wv_b']])[None, :],
            'wo_c': lin_t(c['wo_w']), 'bo_c': c['wo_b'][None, :],
            'g2': p['norm2_g'][None, :], 'bn2': p['norm2_b'][None, :],
            'w1': lin_t(p['ff_w1']), 'bf1': p['ff_b1'][None, :],
            'w2': lin_t(p['ff_w2']), 'bf2': p['ff_b2'][None, :],
            'g3': p['norm3_g'][None, :], 'bn3': p['norm3_b'][None, :],
        }

    enc_layers = [prep_enc(p) for p in params['encoder']]
    dec_layers = [prep_dec(p) for p in params['decoder']]
    enc = {k: jnp.stack([l[k] for l in enc_layers]) for k in _ENC_KEYS}
    dec = {k: jnp.stack([l[k] for l in dec_layers]) for k in _DEC_KEYS}

    V = params['fc_out_w'].shape[0]
    Vp = _round_up(V, 128)                       # lane-dense padded vocab
    wout = jnp.zeros((Vp, D), jnp.float32).at[:V].set(params['fc_out_w'])
    bout = jnp.zeros((Vp,), jnp.float32).at[:V].set(params['fc_out_b'])

    return {
        'num_heads': H,
        'd_model': D,
        'vocab': V,
        'embed_scaled': params['embed'] * math.sqrt(D),  # fold sqrt(D) in
        'pe': params['pe'],
        'enc': enc,
        'dec': dec,
        'wout': jnp.asarray(wout.T, dtype=jnp.bfloat16),  # (D, Vp) bf16
        'bout': bout[None, :],                            # (1, Vp) f32
    }


def seq2seq_forward(prep, src, tgt, pad_id=0):
    H = prep['num_heads']
    D = prep['d_model']
    Dh = D // H
    V = prep['vocab']
    B, S = src.shape
    _, T = tgt.shape
    Sp = _round_up(S, 8)                 # sublane-dense token dims
    Tp = _round_up(T, 8)

    # embedding (sqrt(D) folded into the table) + positional encoding;
    # dropout == identity.  Token dims padded to sublane multiples.
    src_emb = prep['embed_scaled'][src] + prep['pe'][None, :S]
    tgt_emb = prep['embed_scaled'][tgt] + prep['pe'][None, :T]
    src_emb = jnp.pad(src_emb, ((0, 0), (0, Sp - S), (0, 0))).astype(jnp.float32)
    tgt_emb = jnp.pad(tgt_emb, ((0, 0), (0, Tp - T), (0, 0))).astype(jnp.float32)

    # O(B*L) additive key-padding vectors (full masks built in-kernel).
    src_pad = jnp.pad(src == pad_id, ((0, 0), (0, Sp - S)), constant_values=True)
    tgt_pad = jnp.pad(tgt == pad_id, ((0, 0), (0, Tp - T)), constant_values=True)
    src_base = jnp.where(src_pad, NEG, 0.0).astype(jnp.float32)
    all_src = jnp.all(src_pad[:, :S], axis=-1, keepdims=True)
    real_col = (jnp.arange(Sp) < S)[None, :]
    # fully-masked-row reset over real key positions only (matches reference)
    src_add = jnp.where(all_src & real_col, 0.0, src_base)[:, None, :]  # (B,1,Sp)
    tgt_add = jnp.where(tgt_pad, NEG, 0.0).astype(jnp.float32)[:, None, :]  # (B,1,Tp)

    memory = _encoder_stack(src_emb, src_add, prep['enc'],
                            H=H, Dh=Dh)                          # (B, Sp, D)
    dec_out = _decoder_stack(tgt_emb, memory, src_add, tgt_add,
                             prep['dec'], H=H, Dh=Dh, t_real=T)  # (B, Tp, D)
    logits = _fc_out(dec_out.reshape(B * Tp, D),
                     prep['wout'], prep['bout'])                 # (B*Tp, Vp)
    return logits.reshape(B, Tp, -1)[:, :T, :V]


# -------------------------- deterministic init -----------------------------

def _init_linear(key, out_f, in_f):
    kw, kb = jax.random.split(key)
    bound = 1.0 / math.sqrt(in_f)
    w = jax.random.uniform(kw, (out_f, in_f), jnp.float32, -bound, bound)
    b = jax.random.uniform(kb, (out_f,), jnp.float32, -bound, bound)
    return w, b


def _init_mha(key, d_model):
    ks = jax.random.split(key, 4)
    p = {}
    for name, k in zip(('q', 'k', 'v', 'o'), ks):
        w, b = _init_linear(k, d_model, d_model)
        p[f'w{name}_w'] = w
        p[f'w{name}_b'] = b
    return p


def _init_enc_layer(key, d_model, dim_ff):
    k1, k2 = jax.random.split(key)
    kf1, kf2 = jax.random.split(k2)
    p = {'self_attn': _init_mha(k1, d_model)}
    p['ff_w1'], p['ff_b1'] = _init_linear(kf1, dim_ff, d_model)
    p['ff_w2'], p['ff_b2'] = _init_linear(kf2, d_model, dim_ff)
    for n in ('norm1', 'norm2'):
        p[f'{n}_g'] = jnp.ones((d_model,), jnp.float32)
        p[f'{n}_b'] = jnp.zeros((d_model,), jnp.float32)
    return p


def _init_dec_layer(key, d_model, dim_ff):
    k1, k2, k3 = jax.random.split(key, 3)
    kf1, kf2 = jax.random.split(k3)
    p = {'self_attn': _init_mha(k1, d_model),
         'cross_attn': _init_mha(k2, d_model)}
    p['ff_w1'], p['ff_b1'] = _init_linear(kf1, dim_ff, d_model)
    p['ff_w2'], p['ff_b2'] = _init_linear(kf2, d_model, dim_ff)
    for n in ('norm1', 'norm2', 'norm3'):
        p[f'{n}_g'] = jnp.ones((d_model,), jnp.float32)
        p[f'{n}_b'] = jnp.zeros((d_model,), jnp.float32)
    return p


# ---------------------------------- main -----------------------------------

if __name__ == "__main__":
    vocab_size, d_model, num_heads = 50, 32, 4
    n_enc, n_dec, dim_ff = 2, 2, 64
    B, src_len, tgt_len = 2, 10, 8
    pad_id = 0

    key = jax.random.PRNGKey(0)
    k_embed, k_enc, k_dec, k_out, k_src, k_tgt = jax.random.split(key, 6)

    params = {
        'num_heads': num_heads,
        'embed': jax.random.normal(k_embed, (vocab_size, d_model), jnp.float32),
        'pe': sinusoidal_pe(5000, d_model),
        'encoder': [_init_enc_layer(k, d_model, dim_ff)
                    for k in jax.random.split(k_enc, n_enc)],
        'decoder': [_init_dec_layer(k, d_model, dim_ff)
                    for k in jax.random.split(k_dec, n_dec)],
    }
    params['fc_out_w'], params['fc_out_b'] = _init_linear(k_out, vocab_size, d_model)

    prep = prepare_params(params)

    src = jax.random.randint(k_src, (B, src_len), 1, vocab_size, jnp.int32)
    tgt = jax.random.randint(k_tgt, (B, tgt_len), 1, vocab_size, jnp.int32)
    src = src.at[1, -3:].set(pad_id)   # exercise the padding-mask path
    tgt = tgt.at[1, -2:].set(pad_id)

    logits = seq2seq_forward(prep, src, tgt, pad_id=pad_id)
    jax.block_until_ready(logits)

    assert logits.shape == (B, tgt_len, vocab_size), logits.shape
    assert bool(jnp.all(jnp.isfinite(logits)))
    print("KERNEL_OK")
</pallas_src>

<mosaic_0001>
module attributes {stable_mosaic.version = 11 : i64} {
  func.func @_encoder_stack_kernel(%arg0: i32, %arg1: i32, %arg2: memref<1x16x32xf32, #tpu.memory_space<vmem>>, %arg3: memref<1x1x16xf32, #tpu.memory_space<vmem>>, %arg4: memref<1x32x96xbf16, #tpu.memory_space<vmem>>, %arg5: memref<1x1x96xf32, #tpu.memory_space<vmem>>, %arg6: memref<1x32x32xbf16, #tpu.memory_space<vmem>>, %arg7: memref<1x1x32xf32, #tpu.memory_space<vmem>>, %arg8: memref<1x1x32xf32, #tpu.memory_space<vmem>>, %arg9: memref<1x1x32xf32, #tpu.memory_space<vmem>>, %arg10: memref<1x32x64xbf16, #tpu.memory_space<vmem>>, %arg11: memref<1x1x64xf32, #tpu.memory_space<vmem>>, %arg12: memref<1x64x32xbf16, #tpu.memory_space<vmem>>, %arg13: memref<1x1x32xf32, #tpu.memory_space<vmem>>, %arg14: memref<1x1x32xf32, #tpu.memory_space<vmem>>, %arg15: memref<1x1x32xf32, #tpu.memory_space<vmem>>, %arg16: memref<1x16x32xf32, #tpu.memory_space<vmem>>) attributes {dimension_semantics = [#tpu.dimension_semantics<parallel>, #tpu.dimension_semantics<arbitrary>], iteration_bounds = array<i64: 2, 2>, scalar_prefetch = 0 : i64, scratch_operands = 0 : i64, tpu.core_type = #tpu.core_type<tc>, window_params = [{transform_indices = @transform_0, window_bounds = array<i64: 1, 16, 32>}, {transform_indices = @transform_1, window_bounds = array<i64: 1, 1, 16>}, {transform_indices = @transform_2, window_bounds = array<i64: 1, 32, 96>}, {transform_indices = @transform_3, window_bounds = array<i64: 1, 1, 96>}, {transform_indices = @transform_4, window_bounds = array<i64: 1, 32, 32>}, {transform_indices = @transform_5, window_bounds = array<i64: 1, 1, 32>}, {transform_indices = @transform_6, window_bounds = array<i64: 1, 1, 32>}, {transform_indices = @transform_7, window_bounds = array<i64: 1, 1, 32>}, {transform_indices = @transform_8, window_bounds = array<i64: 1, 32, 64>}, {transform_indices = @transform_9, window_bounds = array<i64: 1, 1, 64>}, {transform_indices = @transform_10, window_bounds = array<i64: 1, 64, 32>}, {transform_indices = @transform_11, window_bounds = array<i64: 1, 1, 32>}, {transform_indices = @transform_12, window_bounds = array<i64: 1, 1, 32>}, {transform_indices = @transform_13, window_bounds = array<i64: 1, 1, 32>}, {transform_indices = @transform_14, window_bounds = array<i64: 1, 16, 32>}]} {
    %c0_i32 = arith.constant 0 : i32
    %0 = arith.cmpi eq, %arg1, %c0_i32 : i32
    %1 = arith.extui %0 : i1 to i32
    %c0_i32_0 = arith.constant 0 : i32
    %2 = arith.cmpi ne, %1, %c0_i32_0 : i32
    scf.if %2 {
      %c0_64 = arith.constant 0 : index
      %c0_65 = arith.constant 0 : index
      %c0_66 = arith.constant 0 : index
      %130 = vector.load %arg2[%c0_64, %c0_65, %c0_66] : memref<1x16x32xf32, #tpu.memory_space<vmem>>, vector<1x16x32xf32>
      %131 = vector.shape_cast %130 : vector<1x16x32xf32> to vector<16x32xf32>
      %c0_67 = arith.constant 0 : index
      %c0_68 = arith.constant 0 : index
      %c0_69 = arith.constant 0 : index
      %132 = vector.load %arg16[%c0_67, %c0_68, %c0_69] : memref<1x16x32xf32, #tpu.memory_space<vmem>>, vector<1x16x32xf32>
      %133 = vector.shape_cast %132 : vector<1x16x32xf32> to vector<16x32xf32>
      %134 = vector.shape_cast %131 : vector<16x32xf32> to vector<1x16x32xf32>
      tpu.vector_store %arg16[%c0_67, %c0_68, %c0_69], %134 {strides = array<i32>} : memref<1x16x32xf32, #tpu.memory_space<vmem>>, vector<1x16x32xf32>,
    } else {
    }
    %c0 = arith.constant 0 : index
    %c0_1 = arith.constant 0 : index
    %c0_2 = arith.constant 0 : index
    %3 = vector.load %arg16[%c0, %c0_1, %c0_2] : memref<1x16x32xf32, #tpu.memory_space<vmem>>, vector<1x16x32xf32>
    %4 = vector.shape_cast %3 : vector<1x16x32xf32> to vector<16x32xf32>
    %c0_3 = arith.constant 0 : index
    %c0_4 = arith.constant 0 : index
    %c0_5 = arith.constant 0 : index
    %5 = vector.load %arg4[%c0_3, %c0_4, %c0_5] : memref<1x32x96xbf16, #tpu.memory_space<vmem>>, vector<1x32x96xbf16>
    %6 = vector.shape_cast %5 : vector<1x32x96xbf16> to vector<32x96xbf16>
    %c0_6 = arith.constant 0 : index
    %c0_7 = arith.constant 0 : index
    %c0_8 = arith.constant 0 : index
    %7 = vector.load %arg5[%c0_6, %c0_7, %c0_8] : memref<1x1x96xf32, #tpu.memory_space<vmem>>, vector<1x1x96xf32>
    %8 = vector.shape_cast %7 : vector<1x1x96xf32> to vector<1x96xf32>
    %9 = arith.truncf %4 : vector<16x32xf32> to vector<16x32xbf16>
    %cst = arith.constant dense<0.000000e+00> : vector<16x96xf32>
    %10 = tpu.matmul %9, %6, %cst {dimension_numbers = #tpu.dot_dimension_numbers<[1], [0], [0], [1], [0, 0, 1, 1], [], []>} : vector<16x32xbf16>, vector<32x96xbf16>, vector<16x96xf32> -> vector<16x96xf32>
    %11 = vector.broadcast %8 : vector<1x96xf32> to vector<16x96xf32>
    %12 = arith.addf %10, %11 : vector<16x96xf32>
    %13 = vector.extract_strided_slice %12 {offsets = [0, 0], sizes = [16, 32], strides = [1, 1]} : vector<16x96xf32> to vector<16x32xf32>
    %14 = vector.extract_strided_slice %12 {offsets = [0, 32], sizes = [16, 32], strides = [1, 1]} : vector<16x96xf32> to vector<16x32xf32>
    %15 = vector.extract_strided_slice %12 {offsets = [0, 64], sizes = [16, 32], strides = [1, 1]} : vector<16x96xf32> to vector<16x32xf32>
    %c0_9 = arith.constant 0 : index
    %c0_10 = arith.constant 0 : index
    %c0_11 = arith.constant 0 : index
    %16 = vector.load %arg6[%c0_9, %c0_10, %c0_11] : memref<1x32x32xbf16, #tpu.memory_space<vmem>>, vector<1x32x32xbf16>
    %17 = vector.shape_cast %16 : vector<1x32x32xbf16> to vector<32x32xbf16>
    %c0_12 = arith.constant 0 : index
    %c0_13 = arith.constant 0 : index
    %c0_14 = arith.constant 0 : index
    %18 = vector.load %arg7[%c0_12, %c0_13, %c0_14] : memref<1x1x32xf32, #tpu.memory_space<vmem>>, vector<1x1x32xf32>
    %19 = vector.shape_cast %18 : vector<1x1x32xf32> to vector<1x32xf32>
    %c0_15 = arith.constant 0 : index
    %c0_16 = arith.constant 0 : index
    %c0_17 = arith.constant 0 : index
    %20 = vector.load %arg3[%c0_15, %c0_16, %c0_17] : memref<1x1x16xf32, #tpu.memory_space<vmem>>, vector<1x1x16xf32>
    %21 = vector.shape_cast %20 : vector<1x1x16xf32> to vector<1x16xf32>
    %22 = vector.shape_cast %13 : vector<16x32xf32> to vector<16x4x8xf32>
    %23 = tpu.transpose %22, [1, 0, 2] : vector<16x4x8xf32> -> vector<4x16x8xf32>
    %24 = vector.shape_cast %14 : vector<16x32xf32> to vector<16x4x8xf32>
    %25 = tpu.transpose %24, [1, 0, 2] : vector<16x4x8xf32> -> vector<4x16x8xf32>
    %26 = vector.shape_cast %15 : vector<16x32xf32> to vector<16x4x8xf32>
    %27 = tpu.transpose %26, [1, 0, 2] : vector<16x4x8xf32> -> vector<4x16x8xf32>
    %28 = arith.truncf %23 : vector<4x16x8xf32> to vector<4x16x8xbf16>
    %29 = arith.truncf %25 : vector<4x16x8xf32> to vector<4x16x8xbf16>
    "tpu.trace_start"() <{level = 10 : i32, message = "hqd,hkd->hqk"}> : () -> ()
    %cst_18 = arith.constant dense<0.000000e+00> : vector<4x16x16xf32>
    %30 = tpu.matmul %28, %29, %cst_18 {dimension_numbers = #tpu.dot_dimension_numbers<[2], [2], [1], [1], [0, 0, 0, 1, 1, 1], [0], [0]>} : vector<4x16x8xbf16>, vector<4x16x8xbf16>, vector<4x16x16xf32> -> vector<4x16x16xf32>
    "tpu.trace_stop"() : () -> ()
    %cst_19 = arith.constant 0.353553385 : f32
    %31 = vector.broadcast %cst_19 : f32 to vector<4x16x16xf32>
    %32 = arith.mulf %30, %31 : vector<4x16x16xf32>
    %33 = vector.shape_cast %21 : vector<1x16xf32> to vector<1x1x16xf32>
    %34 = vector.broadcast %33 : vector<1x1x16xf32> to vector<4x16x16xf32>
    %35 = arith.addf %32, %34 : vector<4x16x16xf32>
    %cst_20 = arith.constant dense<0xFF800000> : vector<4x16xf32>
    %36 = vector.multi_reduction <maximumf>, %35, %cst_20 [2] : vector<4x16x16xf32> to vector<4x16xf32>
    %37 = vector.shape_cast %36 : vector<4x16xf32> to vector<4x16x1xf32>
    %38 = vector.broadcast %37 : vector<4x16x1xf32> to vector<4x16x16xf32>
    %39 = arith.subf %35, %38 : vector<4x16x16xf32>
    %40 = math.exp %39 : vector<4x16x16xf32>
    %cst_21 = arith.constant dense<0.000000e+00> : vector<4x16xf32>
    %41 = vector.multi_reduction <add>, %40, %cst_21 [2] : vector<4x16x16xf32> to vector<4x16xf32>
    %42 = vector.shape_cast %41 : vector<4x16xf32> to vector<4x16x1xf32>
    %43 = tpu.reciprocal %42 {approx = true} : vector<4x16x1xf32> -> vector<4x16x1xf32>
    %44 = vector.broadcast %43 : vector<4x16x1xf32> to vector<4x16x16xf32>
    %45 = arith.mulf %40, %44 : vector<4x16x16xf32>
    %46 = arith.truncf %45 : vector<4x16x16xf32> to vector<4x16x16xbf16>
    %47 = arith.truncf %27 : vector<4x16x8xf32> to vector<4x16x8xbf16>
    "tpu.trace_start"() <{level = 10 : i32, message = "hqk,hkd->hqd"}> : () -> ()
    %cst_22 = arith.constant dense<0.000000e+00> : vector<4x16x8xf32>
    %48 = tpu.matmul %46, %47, %cst_22 {dimension_numbers = #tpu.dot_dimension_numbers<[2], [1], [1], [2], [0, 0, 0, 1, 1, 2], [0], [0]>} : vector<4x16x16xbf16>, vector<4x16x8xbf16>, vector<4x16x8xf32> -> vector<4x16x8xf32>
    "tpu.trace_stop"() : () -> ()
    %49 = tpu.transpose %48, [1, 0, 2] : vector<4x16x8xf32> -> vector<16x4x8xf32>
    %50 = vector.shape_cast %49 : vector<16x4x8xf32> to vector<16x32xf32>
    %51 = arith.truncf %50 : vector<16x32xf32> to vector<16x32xbf16>
    %cst_23 = arith.constant dense<0.000000e+00> : vector<16x32xf32>
    %52 = tpu.matmul %51, %17, %cst_23 {dimension_numbers = #tpu.dot_dimension_numbers<[1], [0], [0], [1], [0, 0, 1, 1], [], []>} : vector<16x32xbf16>, vector<32x32xbf16>, vector<16x32xf32> -> vector<16x32xf32>
    %53 = vector.broadcast %19 : vector<1x32xf32> to vector<16x32xf32>
    %54 = arith.addf %52, %53 : vector<16x32xf32>
    %55 = arith.addf %4, %54 : vector<16x32xf32>
    %c0_24 = arith.constant 0 : index
    %c0_25 = arith.constant 0 : index
    %c0_26 = arith.constant 0 : index
    %56 = vector.load %arg8[%c0_24, %c0_25, %c0_26] : memref<1x1x32xf32, #tpu.memory_space<vmem>>, vector<1x1x32xf32>
    %57 = vector.shape_cast %56 : vector<1x1x32xf32> to vector<1x32xf32>
    %c0_27 = arith.constant 0 : index
    %c0_28 = arith.constant 0 : index
    %c0_29 = arith.constant 0 : index
    %58 = vector.load %arg9[%c0_27, %c0_28, %c0_29] : memref<1x1x32xf32, #tpu.memory_space<vmem>>, vector<1x1x32xf32>
    %59 = vector.shape_cast %58 : vector<1x1x32xf32> to vector<1x32xf32>
    %cst_30 = arith.constant dense<0.000000e+00> : vector<16xf32>
    %60 = vector.multi_reduction <add>, %55, %cst_30 [1] : vector<16x32xf32> to vector<16xf32>
    %61 = vector.shape_cast %60 : vector<16xf32> to vector<16x1xf32>
    %cst_31 = arith.constant 3.200000e+01 : f32
    %62 = vector.broadcast %cst_31 : f32 to vector<16x1xf32>
    %63 = arith.divf %61, %62 : vector<16x1xf32>
    %64 = vector.broadcast %63 : vector<16x1xf32> to vector<16x32xf32>
    %65 = arith.subf %55, %64 : vector<16x32xf32>
    %66 = arith.mulf %65, %65 : vector<16x32xf32>
    %cst_32 = arith.constant dense<0.000000e+00> : vector<16xf32>
    %67 = vector.multi_reduction <add>, %66, %cst_32 [1] : vector<16x32xf32> to vector<16xf32>
    %68 = vector.shape_cast %67 : vector<16xf32> to vector<16x1xf32>
    %cst_33 = arith.constant 3.200000e+01 : f32
    %69 = vector.broadcast %cst_33 : f32 to vector<16x1xf32>
    %70 = arith.divf %68, %69 : vector<16x1xf32>
    %71 = vector.broadcast %63 : vector<16x1xf32> to vector<16x32xf32>
    %72 = arith.subf %55, %71 : vector<16x32xf32>
    %cst_34 = arith.constant 9.99999974E-6 : f32
    %73 = vector.broadcast %cst_34 : f32 to vector<16x1xf32>
    %74 = arith.addf %70, %73 : vector<16x1xf32>
    %75 = math.rsqrt %74 : vector<16x1xf32>
    %76 = vector.broadcast %75 : vector<16x1xf32> to vector<16x32xf32>
    %77 = arith.mulf %72, %76 : vector<16x32xf32>
    %78 = vector.broadcast %57 : vector<1x32xf32> to vector<16x32xf32>
    %79 = arith.mulf %77, %78 : vector<16x32xf32>
    %80 = vector.broadcast %59 : vector<1x32xf32> to vector<16x32xf32>
    %81 = arith.addf %79, %80 : vector<16x32xf32>
    %c0_35 = arith.constant 0 : index
    %c0_36 = arith.constant 0 : index
    %c0_37 = arith.constant 0 : index
    %82 = vector.load %arg10[%c0_35, %c0_36, %c0_37] : memref<1x32x64xbf16, #tpu.memory_space<vmem>>, vector<1x32x64xbf16>
    %83 = vector.shape_cast %82 : vector<1x32x64xbf16> to vector<32x64xbf16>
    %c0_38 = arith.constant 0 : index
    %c0_39 = arith.constant 0 : index
    %c0_40 = arith.constant 0 : index
    %84 = vector.load %arg11[%c0_38, %c0_39, %c0_40] : memref<1x1x64xf32, #tpu.memory_space<vmem>>, vector<1x1x64xf32>
    %85 = vector.shape_cast %84 : vector<1x1x64xf32> to vector<1x64xf32>
    %86 = arith.truncf %81 : vector<16x32xf32> to vector<16x32xbf16>
    %cst_41 = arith.constant dense<0.000000e+00> : vector<16x64xf32>
    %87 = tpu.matmul %86, %83, %cst_41 {dimension_numbers = #tpu.dot_dimension_numbers<[1], [0], [0], [1], [0, 0, 1, 1], [], []>} : vector<16x32xbf16>, vector<32x64xbf16>, vector<16x64xf32> -> vector<16x64xf32>
    %88 = vector.broadcast %85 : vector<1x64xf32> to vector<16x64xf32>
    %89 = arith.addf %87, %88 : vector<16x64xf32>
    %cst_42 = arith.constant 0.000000e+00 : f32
    %90 = vector.broadcast %cst_42 : f32 to vector<16x64xf32>
    %91 = arith.maximumf %89, %90 : vector<16x64xf32>
    %c0_43 = arith.constant 0 : index
    %c0_44 = arith.constant 0 : index
    %c0_45 = arith.constant 0 : index
    %92 = vector.load %arg12[%c0_43, %c0_44, %c0_45] : memref<1x64x32xbf16, #tpu.memory_space<vmem>>, vector<1x64x32xbf16>
    %93 = vector.shape_cast %92 : vector<1x64x32xbf16> to vector<64x32xbf16>
    %c0_46 = arith.constant 0 : index
    %c0_47 = arith.constant 0 : index
    %c0_48 = arith.constant 0 : index
    %94 = vector.load %arg13[%c0_46, %c0_47, %c0_48] : memref<1x1x32xf32, #tpu.memory_space<vmem>>, vector<1x1x32xf32>
    %95 = vector.shape_cast %94 : vector<1x1x32xf32> to vector<1x32xf32>
    %96 = arith.truncf %91 : vector<16x64xf32> to vector<16x64xbf16>
    %cst_49 = arith.constant dense<0.000000e+00> : vector<16x32xf32>
    %97 = tpu.matmul %96, %93, %cst_49 {dimension_numbers = #tpu.dot_dimension_numbers<[1], [0], [0], [1], [0, 0, 1, 1], [], []>} : vector<16x64xbf16>, vector<64x32xbf16>, vector<16x32xf32> -> vector<16x32xf32>
    %98 = vector.broadcast %95 : vector<1x32xf32> to vector<16x32xf32>
    %99 = arith.addf %97, %98 : vector<16x32xf32>
    %100 = arith.addf %81, %99 : vector<16x32xf32>
    %c0_50 = arith.constant 0 : index
    %c0_51 = arith.constant 0 : index
    %c0_52 = arith.constant 0 : index
    %101 = vector.load %arg14[%c0_50, %c0_51, %c0_52] : memref<1x1x32xf32, #tpu.memory_space<vmem>>, vector<1x1x32xf32>
    %102 = vector.shape_cast %101 : vector<1x1x32xf32> to vector<1x32xf32>
    %c0_53 = arith.constant 0 : index
    %c0_54 = arith.constant 0 : index
    %c0_55 = arith.constant 0 : index
    %103 = vector.load %arg15[%c0_53, %c0_54, %c0_55] : memref<1x1x32xf32, #tpu.memory_space<vmem>>, vector<1x1x32xf32>
    %104 = vector.shape_cast %103 : vector<1x1x32xf32> to vector<1x32xf32>
    %cst_56 = arith.constant dense<0.000000e+00> : vector<16xf32>
    %105 = vector.multi_reduction <add>, %100, %cst_56 [1] : vector<16x32xf32> to vector<16xf32>
    %106 = vector.shape_cast %105 : vector<16xf32> to vector<16x1xf32>
    %cst_57 = arith.constant 3.200000e+01 : f32
    %107 = vector.broadcast %cst_57 : f32 to vector<16x1xf32>
    %108 = arith.divf %106, %107 : vector<16x1xf32>
    %109 = vector.broadcast %108 : vector<16x1xf32> to vector<16x32xf32>
    %110 = arith.subf %100, %109 : vector<16x32xf32>
    %111 = arith.mulf %110, %110 : vector<16x32xf32>
    %cst_58 = arith.constant dense<0.000000e+00> : vector<16xf32>
    %112 = vector.multi_reduction <add>, %111, %cst_58 [1] : vector<16x32xf32> to vector<16xf32>
    %113 = vector.shape_cast %112 : vector<16xf32> to vector<16x1xf32>
    %cst_59 = arith.constant 3.200000e+01 : f32
    %114 = vector.broadcast %cst_59 : f32 to vector<16x1xf32>
    %115 = arith.divf %113, %114 : vector<16x1xf32>
    %116 = vector.broadcast %108 : vector<16x1xf32> to vector<16x32xf32>
    %117 = arith.subf %100, %116 : vector<16x32xf32>
    %cst_60 = arith.constant 9.99999974E-6 : f32
    %118 = vector.broadcast %cst_60 : f32 to vector<16x1xf32>
    %119 = arith.addf %115, %118 : vector<16x1xf32>
    %120 = math.rsqrt %119 : vector<16x1xf32>
    %121 = vector.broadcast %120 : vector<16x1xf32> to vector<16x32xf32>
    %122 = arith.mulf %117, %121 : vector<16x32xf32>
    %123 = vector.broadcast %102 : vector<1x32xf32> to vector<16x32xf32>
    %124 = arith.mulf %122, %123 : vector<16x32xf32>
    %125 = vector.broadcast %104 : vector<1x32xf32> to vector<16x32xf32>
    %126 = arith.addf %124, %125 : vector<16x32xf32>
    %c0_61 = arith.constant 0 : index
    %c0_62 = arith.constant 0 : index
    %c0_63 = arith.constant 0 : index
    %127 = vector.load %arg16[%c0_61, %c0_62, %c0_63] : memref<1x16x32xf32, #tpu.memory_space<vmem>>, vector<1x16x32xf32>
    %128 = vector.shape_cast %127 : vector<1x16x32xf32> to vector<16x32xf32>
    %129 = vector.shape_cast %126 : vector<16x32xf32> to vector<1x16x32xf32>
    tpu.vector_store %arg16[%c0_61, %c0_62, %c0_63], %129 {strides = array<i32>} : memref<1x16x32xf32, #tpu.memory_space<vmem>>, vector<1x16x32xf32>,
    return
  }
  func.func @transform_0(%arg0: i32, %arg1: i32) -> (i32, i32, i32) {
    %c0_i32 = arith.constant 0 : i32
    %c0_i32_0 = arith.constant 0 : i32
    %c0_i32_1 = arith.constant 0 : i32
    return %arg0, %c0_i32, %c0_i32_0 : i32, i32, i32
  }
  func.func @transform_1(%arg0: i32, %arg1: i32) -> (i32, i32, i32) {
    %c0_i32 = arith.constant 0 : i32
    %c0_i32_0 = arith.constant 0 : i32
    %c0_i32_1 = arith.constant 0 : i32
    return %arg0, %c0_i32, %c0_i32_0 : i32, i32, i32
  }
  func.func @transform_2(%arg0: i32, %arg1: i32) -> (i32, i32, i32) {
    %c0_i32 = arith.constant 0 : i32
    %c0_i32_0 = arith.constant 0 : i32
    %c0_i32_1 = arith.constant 0 : i32
    return %arg1, %c0_i32, %c0_i32_0 : i32, i32, i32
  }
  func.func @transform_3(%arg0: i32, %arg1: i32) -> (i32, i32, i32) {
    %c0_i32 = arith.constant 0 : i32
    %c0_i32_0 = arith.constant 0 : i32
    %c0_i32_1 = arith.constant 0 : i32
    return %arg1, %c0_i32, %c0_i32_0 : i32, i32, i32
  }
  func.func @transform_4(%arg0: i32, %arg1: i32) -> (i32, i32, i32) {
    %c0_i32 = arith.constant 0 : i32
    %c0_i32_0 = arith.constant 0 : i32
    %c0_i32_1 = arith.constant 0 : i32
    return %arg1, %c0_i32, %c0_i32_0 : i32, i32, i32
  }
  func.func @transform_5(%arg0: i32, %arg1: i32) -> (i32, i32, i32) {
    %c0_i32 = arith.constant 0 : i32
    %c0_i32_0 = arith.constant 0 : i32
    %c0_i32_1 = arith.constant 0 : i32
    return %arg1, %c0_i32, %c0_i32_0 : i32, i32, i32
  }
  func.func @transform_6(%arg0: i32, %arg1: i32) -> (i32, i32, i32) {
    %c0_i32 = arith.constant 0 : i32
    %c0_i32_0 = arith.constant 0 : i32
    %c0_i32_1 = arith.constant 0 : i32
    return %arg1, %c0_i32, %c0_i32_0 : i32, i32, i32
  }
  func.func @transform_7(%arg0: i32, %arg1: i32) -> (i32, i32, i32) {
    %c0_i32 = arith.constant 0 : i32
    %c0_i32_0 = arith.constant 0 : i32
    %c0_i32_1 = arith.constant 0 : i32
    return %arg1, %c0_i32, %c0_i32_0 : i32, i32, i32
  }
  func.func @transform_8(%arg0: i32, %arg1: i32) -> (i32, i32, i32) {
    %c0_i32 = arith.constant 0 : i32
    %c0_i32_0 = arith.constant 0 : i32
    %c0_i32_1 = arith.constant 0 : i32
    return %arg1, %c0_i32, %c0_i32_0 : i32, i32, i32
  }
  func.func @transform_9(%arg0: i32, %arg1: i32) -> (i32, i32, i32) {
    %c0_i32 = arith.constant 0 : i32
    %c0_i32_0 = arith.constant 0 : i32
    %c0_i32_1 = arith.constant 0 : i32
    return %arg1, %c0_i32, %c0_i32_0 : i32, i32, i32
  }
  func.func @transform_10(%arg0: i32, %arg1: i32) -> (i32, i32, i32) {
    %c0_i32 = arith.constant 0 : i32
    %c0_i32_0 = arith.constant 0 : i32
    %c0_i32_1 = arith.constant 0 : i32
    return %arg1, %c0_i32, %c0_i32_0 : i32, i32, i32
  }
  func.func @transform_11(%arg0: i32, %arg1: i32) -> (i32, i32, i32) {
    %c0_i32 = arith.constant 0 : i32
    %c0_i32_0 = arith.constant 0 : i32
    %c0_i32_1 = arith.constant 0 : i32
    return %arg1, %c0_i32, %c0_i32_0 : i32, i32, i32
  }
  func.func @transform_12(%arg0: i32, %arg1: i32) -> (i32, i32, i32) {
    %c0_i32 = arith.constant 0 : i32
    %c0_i32_0 = arith.constant 0 : i32
    %c0_i32_1 = arith.constant 0 : i32
    return %arg1, %c0_i32, %c0_i32_0 : i32, i32, i32
  }
  func.func @transform_13(%arg0: i32, %arg1: i32) -> (i32, i32, i32) {
    %c0_i32 = arith.constant 0 : i32
    %c0_i32_0 = arith.constant 0 : i32
    %c0_i32_1 = arith.constant 0 : i32
    return %arg1, %c0_i32, %c0_i32_0 : i32, i32, i32
  }
  func.func @transform_14(%arg0: i32, %arg1: i32) -> (i32, i32, i32) {
    %c0_i32 = arith.constant 0 : i32
    %c0_i32_0 = arith.constant 0 : i32
    %c0_i32_1 = arith.constant 0 : i32
    return %arg0, %c0_i32, %c0_i32_0 : i32, i32, i32
  }
}

</mosaic_0001>

<llo_original>
// kernel: tpu_custom_call.1
$region0: #{tpu_custom_call.1}
  #allocation0 [shape = 'u32[]', space=smem, size = 0x4, offset = 0x4, fixed_abs, tag = 'smem constant byte address 0x4 - core index']
  #allocation1 [shape = 'u32[144,128]{1,0:T(1,128)}', space=vmem, size = 0x12000, scoped, tag = 'internal scratch']
  %s0 = inlined_call_operand.hbm [shape: f32[2,16,32], index: 0, kind: input, shape index: {}, may-alias: {0,14}]
  %s1 = inlined_call_operand.vmem [shape: f32[2,1,16], index: 1, kind: input, shape index: {}]
  %s2 = inlined_call_operand.vmem [shape: bf16[2,32,96], index: 2, kind: input, shape index: {}]
  %s3 = inlined_call_operand.vmem [shape: f32[2,1,96], index: 3, kind: input, shape index: {}]
  %s4 = inlined_call_operand.vmem [shape: bf16[2,32,32], index: 4, kind: input, shape index: {}]
  %s5 = inlined_call_operand.vmem [shape: f32[2,1,32], index: 5, kind: input, shape index: {}]
  %s6 = inlined_call_operand.vmem [shape: f32[2,1,32], index: 6, kind: input, shape index: {}]
  %s7 = inlined_call_operand.vmem [shape: f32[2,1,32], index: 7, kind: input, shape index: {}]
  %s8 = inlined_call_operand.vmem [shape: bf16[2,32,64], index: 8, kind: input, shape index: {}]
  %s9 = inlined_call_operand.vmem [shape: f32[2,1,64], index: 9, kind: input, shape index: {}]
  %s10 = inlined_call_operand.vmem [shape: bf16[2,64,32], index: 10, kind: input, shape index: {}]
  %s11 = inlined_call_operand.vmem [shape: f32[2,1,32], index: 11, kind: input, shape index: {}]
  %s12 = inlined_call_operand.vmem [shape: f32[2,1,32], index: 12, kind: input, shape index: {}]
  %s13 = inlined_call_operand.vmem [shape: f32[2,1,32], index: 13, kind: input, shape index: {}]
  %s14 = inlined_call_operand.hbm [shape: f32[2,16,32], index: 14, kind: output, shape index: {}, may-alias: {0,14}]
  %s15 = sld [smem:[#allocation0]]
  $region97: #{tpu_custom_call.1} parent=0
    _
  %s17 = ssub.s32 1, %s15
  %s18 = scalar_select 0, %s17, %s15
  $region1: #{tpu_custom_call.1} parent=0
    #allocation2 [shape = 'u8[16384]{0}', space=vmem, size = 0x4000, scoped, tag = 'input window, operand 0']
    #allocation3 [shape = 's32[2]{0}', space=sflag, size = 0x8, scoped, tag = 'scoped memory for tpu_custom_call.1']
    #allocation4 [shape = 's32[2]{0}', space=sflag, size = 0x8, scoped, tag = 'scoped memory for tpu_custom_call.1']
    #allocation5 [shape = 'u8[16384]{0}', space=vmem, size = 0x4000, scoped, tag = 'output window, operand 0']
    %19 = vsyncpa [#allocation3], 0
    %s20 = scalar_lea.sflag [#allocation3], 1
    %21 = vsyncpa %s20, 0
    %22 = vsyncpa [#allocation4], 0
    %s23 = scalar_lea.sflag [#allocation4], 1
    %24 = vsyncpa %s23, 0
    loop: start=0, step=1, limit=6
    $region2: #{tpu_custom_call.1} parent=1 // loop_pre_header
      _
    $region3: #{tpu_custom_call.1} parent=1 // loop_header
      %s26 = sphi 0, %s30
      %p27 = scmp.ge.s32.totalorder %s26, 6
      %s33 = sphi 0, %s45
      %s34 = sphi 0, %s41
      %s35 = sphi 0, %s33
      %s36 = sphi 0, %s34
      %s37 = sphi 0, %s35
      %s38 = sphi 0, %s36
      %s48 = sphi 0, %s50
      %s51 = sphi 0, %s48
      %s52 = sphi 0, %s51
      %s68 = sphi 0, %s52
      %s74 = sphi 0, %s76
      %s77 = sphi 0, %s74
      %s78 = sphi 0, %s77
      %s94 = sphi 0, %s78
      %s100 = sphi 0, %s102
      %s103 = sphi 0, %s100
      %s104 = sphi 0, %s103
      %s120 = sphi 0, %s104
      %s126 = sphi 0, %s128
      %s129 = sphi 0, %s126
      %s130 = sphi 0, %s129
      %s146 = sphi 0, %s130
      %s152 = sphi 0, %s154
      %s155 = sphi 0, %s152
      %s156 = sphi 0, %s155
      %s172 = sphi 0, %s156
      %s178 = sphi 0, %s180
      %s181 = sphi 0, %s178
      %s182 = sphi 0, %s181
      %s198 = sphi 0, %s182
      %s204 = sphi 0, %s206
      %s207 = sphi 0, %s204
      %s208 = sphi 0, %s207
      %s224 = sphi 0, %s208
      %s230 = sphi 0, %s232
      %s233 = sphi 0, %s230
      %s234 = sphi 0, %s233
      %s250 = sphi 0, %s234
      %s256 = sphi 0, %s258
      %s259 = sphi 0, %s256
      %s260 = sphi 0, %s259
      %s276 = sphi 0, %s260
      %s282 = sphi 0, %s284
      %s285 = sphi 0, %s282
      %s286 = sphi 0, %s285
      %s302 = sphi 0, %s286
      %s308 = sphi 0, %s310
      %s311 = sphi 0, %s308
      %s312 = sphi 0, %s311
      %s328 = sphi 0, %s312
      %s334 = sphi 0, %s336
      %s337 = sphi 0, %s334
      %s338 = sphi 0, %s337
      %s354 = sphi 0, %s338
      %s360 = sphi 0, %s362
      %s363 = sphi 0, %s360
      %s364 = sphi 0, %s363
      %s380 = sphi 0, %s364
      %s386 = sphi 0, %s388
      %s389 = sphi 0, %s386
      %s390 = sphi 0, %s389
      %s406 = sphi 0, %s390
      %s412 = sphi 0, %s414
      %s415 = sphi 0, %s412
      %s416 = sphi 0, %s415
      %s432 = sphi 0, %s416
    $region4: #{tpu_custom_call.1} parent=1 // loop_header_branch
      %29 = sbr.rel (%p27) target = $region8
    $region5: #{tpu_custom_call.1} parent=1 // loop_body
      %s31 = ssub.s32 %s26, 1
      %s32 = ssub.s32 %s26, 2
      %s39 = sadd.s32 1, %s34
      %p40 = scmp.ge.s32.totalorder %s39, 2
      %s41 = scalar_select %p40, 0, %s39
      %s42 = sadd.s32 1, %s33
      %s43 = scalar_select %p40, %s42, %s33
      %p44 = scmp.ge.s32.totalorder %s43, 2
      %s45 = scalar_select %p44, 0, %s43
      %s46 = ssub.s32 %s33, %s45
      %p47 = scmp.eq.s32.totalorder %s46, 0
      %s49 = sadd.s32 %s48, 1
      %s50 = scalar_select %p47, %s48, %s49
      %p53 = pneg %p47
      %p54 = scmp.eq.s32.totalorder %s26, 3
      %p55 = por %p53, %p54
      %p56 = scmp.ne.s32.totalorder %s48, %s51
      %p57 = scmp.eq.s32.totalorder %s26, 0
      %p58 = por %p56, %p57
      %p59 = scmp.ne.s32.totalorder %s48, %s51
      %p60 = scmp.eq.s32.totalorder %s31, 3
      %p61 = por %p59, %p60
      %p62 = scmp.ne.s32.totalorder %s51, %s52
      %p63 = scmp.eq.s32.totalorder %s31, 0
      %p64 = por %p62, %p63
      %p65 = scmp.ne.s32.totalorder %s51, %s52
      %p66 = scmp.eq.s32.totalorder %s32, 3
      %p67 = por %p65, %p66
      %p69 = scmp.ne.s32.totalorder %s52, %s68
      %p70 = scmp.eq.s32.totalorder %s32, 0
      %p71 = por %p69, %p70
      %s72 = ssub.s32 %s33, %s45
      %p73 = scmp.eq.s32.totalorder %s72, 0
      %s75 = sadd.s32 %s74, 1
      %s76 = scalar_select %p73, %s74, %s75
      %p79 = pneg %p73
      %p80 = scmp.eq.s32.totalorder %s26, 3
      %p81 = por %p79, %p80
      %p82 = scmp.ne.s32.totalorder %s74, %s77
      %p83 = scmp.eq.s32.totalorder %s26, 0
      %p84 = por %p82, %p83
      %p85 = scmp.ne.s32.totalorder %s74, %s77
      %p86 = scmp.eq.s32.totalorder %s31, 3
      %p87 = por %p85, %p86
      %p88 = scmp.ne.s32.totalorder %s77, %s78
      %p89 = scmp.eq.s32.totalorder %s31, 0
      %p90 = por %p88, %p89
      %p91 = scmp.ne.s32.totalorder %s77, %s78
      %p92 = scmp.eq.s32.totalorder %s32, 3
      %p93 = por %p91, %p92
      %p95 = scmp.ne.s32.totalorder %s78, %s94
      %p96 = scmp.eq.s32.totalorder %s32, 0
      %p97 = por %p95, %p96
      %s98 = ssub.s32 %s34, %s41
      %p99 = scmp.eq.s32.totalorder %s98, 0
      %s101 = sadd.s32 %s100, 1
      %s102 = scalar_select %p99, %s100, %s101
      %p105 = pneg %p99
      %p106 = scmp.eq.s32.totalorder %s26, 3
      %p107 = por %p105, %p106
      %p108 = scmp.ne.s32.totalorder %s100, %s103
      %p109 = scmp.eq.s32.totalorder %s26, 0
      %p110 = por %p108, %p109
      %p111 = scmp.ne.s32.totalorder %s100, %s103
      %p112 = scmp.eq.s32.totalorder %s31, 3
      %p113 = por %p111, %p112
      %p114 = scmp.ne.s32.totalorder %s103, %s104
      %p115 = scmp.eq.s32.totalorder %s31, 0
      %p116 = por %p114, %p115
      %p117 = scmp.ne.s32.totalorder %s103, %s104
      %p118 = scmp.eq.s32.totalorder %s32, 3
      %p119 = por %p117, %p118
      %p121 = scmp.ne.s32.totalorder %s104, %s120
      %p122 = scmp.eq.s32.totalorder %s32, 0
      %p123 = por %p121, %p122
      %s124 = ssub.s32 %s34, %s41
      %p125 = scmp.eq.s32.totalorder %s124, 0
      %s127 = sadd.s32 %s126, 1
      %s128 = scalar_select %p125, %s126, %s127
      %p131 = pneg %p125
      %p132 = scmp.eq.s32.totalorder %s26, 3
      %p133 = por %p131, %p132
      %p134 = scmp.ne.s32.totalorder %s126, %s129
      %p135 = scmp.eq.s32.totalorder %s26, 0
      %p136 = por %p134, %p135
      %p137 = scmp.ne.s32.totalorder %s126, %s129
      %p138 = scmp.eq.s32.totalorder %s31, 3
      %p139 = por %p137, %p138
      %p140 = scmp.ne.s32.totalorder %s129, %s130
      %p141 = scmp.eq.s32.totalorder %s31, 0
      %p142 = por %p140, %p141
      %p143 = scmp.ne.s32.totalorder %s129, %s130
      %p144 = scmp.eq.s32.totalorder %s32, 3
      %p145 = por %p143, %p144
      %p147 = scmp.ne.s32.totalorder %s130, %s146
      %p148 = scmp.eq.s32.totalorder %s32, 0
      %p149 = por %p147, %p148
      %s150 = ssub.s32 %s34, %s41
      %p151 = scmp.eq.s32.totalorder %s150, 0
      %s153 = sadd.s32 %s152, 1
      %s154 = scalar_select %p151, %s152, %s153
      %p157 = pneg %p151
      %p158 = scmp.eq.s32.totalorder %s26, 3
      %p159 = por %p157, %p158
      %p160 = scmp.ne.s32.totalorder %s152, %s155
      %p161 = scmp.eq.s32.totalorder %s26, 0
      %p162 = por %p160, %p161
      %p163 = scmp.ne.s32.totalorder %s152, %s155
      %p164 = scmp.eq.s32.totalorder %s31, 3
      %p165 = por %p163, %p164
      %p166 = scmp.ne.s32.totalorder %s155, %s156
      %p167 = scmp.eq.s32.totalorder %s31, 0
      %p168 = por %p166, %p167
      %p169 = scmp.ne.s32.totalorder %s155, %s156
      %p170 = scmp.eq.s32.totalorder %s32, 3
      %p171 = por %p169, %p170
      %p173 = scmp.ne.s32.totalorder %s156, %s172
      %p174 = scmp.eq.s32.totalorder %s32, 0
      %p175 = por %p173, %p174
      %s176 = ssub.s32 %s34, %s41
      %p177 = scmp.eq.s32.totalorder %s176, 0
      %s179 = sadd.s32 %s178, 1
      %s180 = scalar_select %p177, %s178, %s179
      %p183 = pneg %p177
      %p184 = scmp.eq.s32.totalorder %s26, 3
      %p185 = por %p183, %p184
      %p186 = scmp.ne.s32.totalorder %s178, %s181
      %p187 = scmp.eq.s32.totalorder %s26, 0
      %p188 = por %p186, %p187
      %p189 = scmp.ne.s32.totalorder %s178, %s181
      %p190 = scmp.eq.s32.totalorder %s31, 3
      %p191 = por %p189, %p190
      %p192 = scmp.ne.s32.totalorder %s181, %s182
      %p193 = scmp.eq.s32.totalorder %s31, 0
      %p194 = por %p192, %p193
      %p195 = scmp.ne.s32.totalorder %s181, %s182
      %p196 = scmp.eq.s32.totalorder %s32, 3
      %p197 = por %p195, %p196
      %p199 = scmp.ne.s32.totalorder %s182, %s198
      %p200 = scmp.eq.s32.totalorder %s32, 0
      %p201 = por %p199, %p200
      %s202 = ssub.s32 %s34, %s41
      %p203 = scmp.eq.s32.totalorder %s202, 0
      %s205 = sadd.s32 %s204, 1
      %s206 = scalar_select %p203, %s204, %s205
      %p209 = pneg %p203
      %p210 = scmp.eq.s32.totalorder %s26, 3
      %p211 = por %p209, %p210
      %p212 = scmp.ne.s32.totalorder %s204, %s207
      %p213 = scmp.eq.s32.totalorder %s26, 0
      %p214 = por %p212, %p213
      %p215 = scmp.ne.s32.totalorder %s204, %s207
      %p216 = scmp.eq.s32.totalorder %s31, 3
      %p217 = por %p215, %p216
      %p218 = scmp.ne.s32.totalorder %s207, %s208
      %p219 = scmp.eq.s32.totalorder %s31, 0
      %p220 = por %p218, %p219
      %p221 = scmp.ne.s32.totalorder %s207, %s208
      %p222 = scmp.eq.s32.totalorder %s32, 3
      %p223 = por %p221, %p222
      %p225 = scmp.ne.s32.totalorder %s208, %s224
      %p226 = scmp.eq.s32.totalorder %s32, 0
      %p227 = por %p225, %p226
      %s228 = ssub.s32 %s34, %s41
      %p229 = scmp.eq.s32.totalorder %s228, 0
      %s231 = sadd.s32 %s230, 1
      %s232 = scalar_select %p229, %s230, %s231
      %p235 = pneg %p229
      %p236 = scmp.eq.s32.totalorder %s26, 3
      %p237 = por %p235, %p236
      %p238 = scmp.ne.s32.totalorder %s230, %s233
      %p239 = scmp.eq.s32.totalorder %s26, 0
      %p240 = por %p238, %p239
      %p241 = scmp.ne.s32.totalorder %s230, %s233
      %p242 = scmp.eq.s32.totalorder %s31, 3
      %p243 = por %p241, %p242
      %p244 = scmp.ne.s32.totalorder %s233, %s234
      %p245 = scmp.eq.s32.totalorder %s31, 0
      %p246 = por %p244, %p245
      %p247 = scmp.ne.s32.totalorder %s233, %s234
      %p248 = scmp.eq.s32.totalorder %s32, 3
      %p249 = por %p247, %p248
      %p251 = scmp.ne.s32.totalorder %s234, %s250
      %p252 = scmp.eq.s32.totalorder %s32, 0
      %p253 = por %p251, %p252
      %s254 = ssub.s32 %s34, %s41
      %p255 = scmp.eq.s32.totalorder %s254, 0
      %s257 = sadd.s32 %s256, 1
      %s258 = scalar_select %p255, %s256, %s257
      %p261 = pneg %p255
      %p262 = scmp.eq.s32.totalorder %s26, 3
      %p263 = por %p261, %p262
      %p264 = scmp.ne.s32.totalorder %s256, %s259
      %p265 = scmp.eq.s32.totalorder %s26, 0
      %p266 = por %p264, %p265
      %p267 = scmp.ne.s32.totalorder %s256, %s259
      %p268 = scmp.eq.s32.totalorder %s31, 3
      %p269 = por %p267, %p268
      %p270 = scmp.ne.s32.totalorder %s259, %s260
      %p271 = scmp.eq.s32.totalorder %s31, 0
      %p272 = por %p270, %p271
      %p273 = scmp.ne.s32.totalorder %s259, %s260
      %p274 = scmp.eq.s32.totalorder %s32, 3
      %p275 = por %p273, %p274
      %p277 = scmp.ne.s32.totalorder %s260, %s276
      %p278 = scmp.eq.s32.totalorder %s32, 0
      %p279 = por %p277, %p278
      %s280 = ssub.s32 %s34, %s41
      %p281 = scmp.eq.s32.totalorder %s280, 0
      %s283 = sadd.s32 %s282, 1
      %s284 = scalar_select %p281, %s282, %s283
      %p287 = pneg %p281
      %p288 = scmp.eq.s32.totalorder %s26, 3
      %p289 = por %p287, %p288
      %p290 = scmp.ne.s32.totalorder %s282, %s285
      %p291 = scmp.eq.s32.totalorder %s26, 0
      %p292 = por %p290, %p291
      %p293 = scmp.ne.s32.totalorder %s282, %s285
      %p294 = scmp.eq.s32.totalorder %s31, 3
      %p295 = por %p293, %p294
      %p296 = scmp.ne.s32.totalorder %s285, %s286
      %p297 = scmp.eq.s32.totalorder %s31, 0
      %p298 = por %p296, %p297
      %p299 = scmp.ne.s32.totalorder %s285, %s286
      %p300 = scmp.eq.s32.totalorder %s32, 3
      %p301 = por %p299, %p300
      %p303 = scmp.ne.s32.totalorder %s286, %s302
      %p304 = scmp.eq.s32.totalorder %s32, 0
      %p305 = por %p303, %p304
      %s306 = ssub.s32 %s34, %s41
      %p307 = scmp.eq.s32.totalorder %s306, 0
      %s309 = sadd.s32 %s308, 1
      %s310 = scalar_select %p307, %s308, %s309
      %p313 = pneg %p307
      %p314 = scmp.eq.s32.totalorder %s26, 3
      %p315 = por %p313, %p314
      %p316 = scmp.ne.s32.totalorder %s308, %s311
      %p317 = scmp.eq.s32.totalorder %s26, 0
      %p318 = por %p316, %p317
      %p319 = scmp.ne.s32.totalorder %s308, %s311
      %p320 = scmp.eq.s32.totalorder %s31, 3
      %p321 = por %p319, %p320
      %p322 = scmp.ne.s32.totalorder %s311, %s312
      %p323 = scmp.eq.s32.totalorder %s31, 0
      %p324 = por %p322, %p323
      %p325 = scmp.ne.s32.totalorder %s311, %s312
      %p326 = scmp.eq.s32.totalorder %s32, 3
      %p327 = por %p325, %p326
      %p329 = scmp.ne.s32.totalorder %s312, %s328
      %p330 = scmp.eq.s32.totalorder %s32, 0
      %p331 = por %p329, %p330
      %s332 = ssub.s32 %s34, %s41
      %p333 = scmp.eq.s32.totalorder %s332, 0
      %s335 = sadd.s32 %s334, 1
      %s336 = scalar_select %p333, %s334, %s335
      %p339 = pneg %p333
      %p340 = scmp.eq.s32.totalorder %s26, 3
      %p341 = por %p339, %p340
      %p342 = scmp.ne.s32.totalorder %s334, %s337
      %p343 = scmp.eq.s32.totalorder %s26, 0
      %p344 = por %p342, %p343
      %p345 = scmp.ne.s32.totalorder %s334, %s337
      %p346 = scmp.eq.s32.totalorder %s31, 3
      %p347 = por %p345, %p346
      %p348 = scmp.ne.s32.totalorder %s337, %s338
      %p349 = scmp.eq.s32.totalorder %s31, 0
      %p350 = por %p348, %p349
      %p351 = scmp.ne.s32.totalorder %s337, %s338
      %p352 = scmp.eq.s32.totalorder %s32, 3
      %p353 = por %p351, %p352
      %p355 = scmp.ne.s32.totalorder %s338, %s354
      %p356 = scmp.eq.s32.totalorder %s32, 0
      %p357 = por %p355, %p356
      %s358 = ssub.s32 %s34, %s41
      %p359 = scmp.eq.s32.totalorder %s358, 0
      %s361 = sadd.s32 %s360, 1
      %s362 = scalar_select %p359, %s360, %s361
      %p365 = pneg %p359
      %p366 = scmp.eq.s32.totalorder %s26, 3
      %p367 = por %p365, %p366
      %p368 = scmp.ne.s32.totalorder %s360, %s363
      %p369 = scmp.eq.s32.totalorder %s26, 0
      %p370 = por %p368, %p369
      %p371 = scmp.ne.s32.totalorder %s360, %s363
      %p372 = scmp.eq.s32.totalorder %s31, 3
      %p373 = por %p371, %p372
      %p374 = scmp.ne.s32.totalorder %s363, %s364
      %p375 = scmp.eq.s32.totalorder %s31, 0
      %p376 = por %p374, %p375
      %p377 = scmp.ne.s32.totalorder %s363, %s364
      %p378 = scmp.eq.s32.totalorder %s32, 3
      %p379 = por %p377, %p378
      %p381 = scmp.ne.s32.totalorder %s364, %s380
      %p382 = scmp.eq.s32.totalorder %s32, 0
      %p383 = por %p381, %p382
      %s384 = ssub.s32 %s34, %s41
      %p385 = scmp.eq.s32.totalorder %s384, 0
      %s387 = sadd.s32 %s386, 1
      %s388 = scalar_select %p385, %s386, %s387
      %p391 = pneg %p385
      %p392 = scmp.eq.s32.totalorder %s26, 3
      %p393 = por %p391, %p392
      %p394 = scmp.ne.s32.totalorder %s386, %s389
      %p395 = scmp.eq.s32.totalorder %s26, 0
      %p396 = por %p394, %p395
      %p397 = scmp.ne.s32.totalorder %s386, %s389
      %p398 = scmp.eq.s32.totalorder %s31, 3
      %p399 = por %p397, %p398
      %p400 = scmp.ne.s32.totalorder %s389, %s390
      %p401 = scmp.eq.s32.totalorder %s31, 0
      %p402 = por %p400, %p401
      %p403 = scmp.ne.s32.totalorder %s389, %s390
      %p404 = scmp.eq.s32.totalorder %s32, 3
      %p405 = por %p403, %p404
      %p407 = scmp.ne.s32.totalorder %s390, %s406
      %p408 = scmp.eq.s32.totalorder %s32, 0
      %p409 = por %p407, %p408
      %s410 = ssub.s32 %s33, %s45
      %p411 = scmp.eq.s32.totalorder %s410, 0
      %s413 = sadd.s32 %s412, 1
      %s414 = scalar_select %p411, %s412, %s413
      %p417 = pneg %p411
      %p418 = scmp.eq.s32.totalorder %s26, 3
      %p419 = por %p417, %p418
      %p420 = scmp.ne.s32.totalorder %s412, %s415
      %p421 = scmp.eq.s32.totalorder %s26, 0
      %p422 = por %p420, %p421
      %p423 = scmp.ne.s32.totalorder %s412, %s415
      %p424 = scmp.eq.s32.totalorder %s31, 3
      %p425 = por %p423, %p424
      %p426 = scmp.ne.s32.totalorder %s415, %s416
      %p427 = scmp.eq.s32.totalorder %s31, 0
      %p428 = por %p426, %p427
      %p429 = scmp.ne.s32.totalorder %s415, %s416
      %p430 = scmp.eq.s32.totalorder %s32, 3
      %p431 = por %p429, %p430
      %p433 = scmp.ne.s32.totalorder %s416, %s432
      %p434 = scmp.eq.s32.totalorder %s32, 0
      %p435 = por %p433, %p434
      %p436 = scmp.le.s32.totalorder 1, %s26
      %p437 = scmp.lt.s32.totalorder %s26, 5
      %p438 = pnand %p436, %p437
      %p439 = pneg %p438
      // Predicated region
      $region9: #{tpu_custom_call.1} parent=5 // pred_check
        _
      $region10: #{tpu_custom_call.1} parent=5 // pred_check_branch
        %441 = sbr.rel (%p438) target = $region12
      $region11: #{tpu_custom_call.1} parent=5 // pred_region
        %s442 = ssub.s32 %s26, 1
      $region12: #{tpu_custom_call.1} parent=5 // pred_fallthru
        _
      %p443 = scmp.lt.s32.totalorder %s26, 4
      // Predicated region
      $region13: #{tpu_custom_call.1} parent=5 // pred_check
        %p444 = pneg %p443
      $region14: #{tpu_custom_call.1} parent=5 // pred_check_branch
        %446 = sbr.rel (%p444) target = $region16
      $region15: #{tpu_custom_call.1} parent=5 // pred_region
        // Predicated region
        $region17: #{tpu_custom_call.1} parent=15 // pred_check
          %p447 = pneg %p58
        $region18: #{tpu_custom_call.1} parent=15 // pred_check_branch
          %449 = sbr.rel (%p447) target = $region20
        $region19: #{tpu_custom_call.1} parent=15 // pred_region
          %s450 = sand.u32 %s48, 1
          %s451 = scalar_lea.sflag [#allocation3], %s450
          %s452 = sand.u32 %s48, 1
          %s453 = smul.addr %s452, 16
          %s454 = scalar_lea.vmem [#allocation2], %s453
          %s456 = ssub.s32 256, 256
          %457 = vsyncadd %s451, %s456
          %s458 = smul.addr %s33, 2
          %s459 = smul.addr %s458, 128
          %s460 = scalar_lea.hbm %s0, %s459
          %s461 = sshll.u32 %s454, 4
          %s462 = int_to_ptr.vmem [resolvable:$true] %s461
          %467 = dma.hbm_to_vmem [thread:$0]  %s460, 256, %s462, %s451, 128, 128, 8
        $region20: #{tpu_custom_call.1} parent=15 // pred_fallthru
          _
        // Predicated region
        $region21: #{tpu_custom_call.1} parent=15 // pred_check
          %p468 = pneg %p84
        $region22: #{tpu_custom_call.1} parent=15 // pred_check_branch
          %470 = sbr.rel (%p468) target = $region24
        $region23: #{tpu_custom_call.1} parent=15 // pred_region
          %p471 = scmp.lt.s32.totalorder %s33, 1
          %s472 = scalar_select %p471, %s33, 1
          %s473 = scalar_lea.vmem %s1, %s472
        $region24: #{tpu_custom_call.1} parent=15 // pred_fallthru
          _
        // Predicated region
        $region25: #{tpu_custom_call.1} parent=15 // pred_check
          %p474 = pneg %p110
        $region26: #{tpu_custom_call.1} parent=15 // pred_check_branch
          %476 = sbr.rel (%p474) target = $region28
        $region27: #{tpu_custom_call.1} parent=15 // pred_region
          %p477 = scmp.lt.s32.totalorder %s34, 1
          %s478 = scalar_select %p477, %s34, 1
          %s479 = smul.addr %s478, 4
          %s480 = smul.addr %s479, 4
          %s481 = scalar_lea.vmem %s2, %s480
        $region28: #{tpu_custom_call.1} parent=15 // pred_fallthru
          _
        // Predicated region
        $region29: #{tpu_custom_call.1} parent=15 // pred_check
          %p482 = pneg %p136
        $region30: #{tpu_custom_call.1} parent=15 // pred_check_branch
          %484 = sbr.rel (%p482) target = $region32
        $region31: #{tpu_custom_call.1} parent=15 // pred_region
          %p485 = scmp.lt.s32.totalorder %s34, 1
          %s486 = scalar_select %p485, %s34, 1
          %s487 = scalar_lea.vmem %s3, %s486
        $region32: #{tpu_custom_call.1} parent=15 // pred_fallthru
          _
        // Predicated region
        $region33: #{tpu_custom_call.1} parent=15 // pred_check
          %p488 = pneg %p162
        $region34: #{tpu_custom_call.1} parent=15 // pred_check_branch
          %490 = sbr.rel (%p488) target = $region36
        $region35: #{tpu_custom_call.1} parent=15 // pred_region
          %p491 = scmp.lt.s32.totalorder %s34, 1
          %s492 = scalar_select %p491, %s34, 1
          %s493 = smul.addr %s492, 4
          %s494 = smul.addr %s493, 4
          %s495 = scalar_lea.vmem %s4, %s494
        $region36: #{tpu_custom_call.1} parent=15 // pred_fallthru
          _
        // Predicated region
        $region37: #{tpu_custom_call.1} parent=15 // pred_check
          %p496 = pneg %p188
        $region38: #{tpu_custom_call.1} parent=15 // pred_check_branch
          %498 = sbr.rel (%p496) target = $region40
        $region39: #{tpu_custom_call.1} parent=15 // pred_region
          %p499 = scmp.lt.s32.totalorder %s34, 1
          %s500 = scalar_select %p499, %s34, 1
          %s501 = scalar_lea.vmem %s5, %s500
        $region40: #{tpu_custom_call.1} parent=15 // pred_fallthru
          _
        // Predicated region
        $region41: #{tpu_custom_call.1} parent=15 // pred_check
          %p502 = pneg %p214
        $region42: #{tpu_custom_call.1} parent=15 // pred_check_branch
          %504 = sbr.rel (%p502) target = $region44
        $region43: #{tpu_custom_call.1} parent=15 // pred_region
          %p505 = scmp.lt.s32.totalorder %s34, 1
          %s506 = scalar_select %p505, %s34, 1
          %s507 = scalar_lea.vmem %s6, %s506
        $region44: #{tpu_custom_call.1} parent=15 // pred_fallthru
          _
        // Predicated region
        $region45: #{tpu_custom_call.1} parent=15 // pred_check
          %p508 = pneg %p240
        $region46: #{tpu_custom_call.1} parent=15 // pred_check_branch
          %510 = sbr.rel (%p508) target = $region48
        $region47: #{tpu_custom_call.1} parent=15 // pred_region
          %p511 = scmp.lt.s32.totalorder %s34, 1
          %s512 = scalar_select %p511, %s34, 1
          %s513 = scalar_lea.vmem %s7, %s512
        $region48: #{tpu_custom_call.1} parent=15 // pred_fallthru
          _
        // Predicated region
        $region49: #{tpu_custom_call.1} parent=15 // pred_check
          %p514 = pneg %p266
        $region50: #{tpu_custom_call.1} parent=15 // pred_check_branch
          %516 = sbr.rel (%p514) target = $region52
        $region51: #{tpu_custom_call.1} parent=15 // pred_region
          %p517 = scmp.lt.s32.totalorder %s34, 1
          %s518 = scalar_select %p517, %s34, 1
          %s519 = smul.addr %s518, 4
          %s520 = smul.addr %s519, 4
          %s521 = scalar_lea.vmem %s8, %s520
        $region52: #{tpu_custom_call.1} parent=15 // pred_fallthru
          _
        // Predicated region
        $region53: #{tpu_custom_call.1} parent=15 // pred_check
          %p522 = pneg %p292
        $region54: #{tpu_custom_call.1} parent=15 // pred_check_branch
          %524 = sbr.rel (%p522) target = $region56
        $region55: #{tpu_custom_call.1} parent=15 // pred_region
          %p525 = scmp.lt.s32.totalorder %s34, 1
          %s526 = scalar_select %p525, %s34, 1
          %s527 = scalar_lea.vmem %s9, %s526
        $region56: #{tpu_custom_call.1} parent=15 // pred_fallthru
          _
        // Predicated region
        $region57: #{tpu_custom_call.1} parent=15 // pred_check
          %p528 = pneg %p318
        $region58: #{tpu_custom_call.1} parent=15 // pred_check_branch
          %530 = sbr.rel (%p528) target = $region60
        $region59: #{tpu_custom_call.1} parent=15 // pred_region
          %p531 = scmp.lt.s32.totalorder %s34, 1
          %s532 = scalar_select %p531, %s34, 1
          %s533 = smul.addr %s532, 8
          %s534 = smul.addr %s533, 4
          %s535 = scalar_lea.vmem %s10, %s534
        $region60: #{tpu_custom_call.1} parent=15 // pred_fallthru
          _
        // Predicated region
        $region61: #{tpu_custom_call.1} parent=15 // pred_check
          %p536 = pneg %p344
        $region62: #{tpu_custom_call.1} parent=15 // pred_check_branch
          %538 = sbr.rel (%p536) target = $region64
        $region63: #{tpu_custom_call.1} parent=15 // pred_region
          %p539 = scmp.lt.s32.totalorder %s34, 1
          %s540 = scalar_select %p539, %s34, 1
          %s541 = scalar_lea.vmem %s11, %s540
        $region64: #{tpu_custom_call.1} parent=15 // pred_fallthru
          _
        // Predicated region
        $region65: #{tpu_custom_call.1} parent=15 // pred_check
          %p542 = pneg %p370
        $region66: #{tpu_custom_call.1} parent=15 // pred_check_branch
          %544 = sbr.rel (%p542) target = $region68
        $region67: #{tpu_custom_call.1} parent=15 // pred_region
          %p545 = scmp.lt.s32.totalorder %s34, 1
          %s546 = scalar_select %p545, %s34, 1
          %s547 = scalar_lea.vmem %s12, %s546
        $region68: #{tpu_custom_call.1} parent=15 // pred_fallthru
          _
        // Predicated region
        $region69: #{tpu_custom_call.1} parent=15 // pred_check
          %p548 = pneg %p396
        $region70: #{tpu_custom_call.1} parent=15 // pred_check_branch
          %550 = sbr.rel (%p548) target = $region72
        $region71: #{tpu_custom_call.1} parent=15 // pred_region
          %p551 = scmp.lt.s32.totalorder %s34, 1
          %s552 = scalar_select %p551, %s34, 1
          %s553 = scalar_lea.vmem %s13, %s552
        $region72: #{tpu_custom_call.1} parent=15 // pred_fallthru
          _
      $region16: #{tpu_custom_call.1} parent=5 // pred_fallthru
        _
      %p554 = scmp.le.s32.totalorder 1, %s26
      %p555 = scmp.lt.s32.totalorder %s26, 5
      %p556 = pnand %p554, %p555
      %p557 = pneg %p556
      // Predicated region
      $region73: #{tpu_custom_call.1} parent=5 // pred_check
        _
      $region74: #{tpu_custom_call.1} parent=5 // pred_check_branch
        %559 = sbr.rel (%p556) target = $region76
      $region75: #{tpu_custom_call.1} parent=5 // pred_region
        %s560 = ssub.s32 %s26, 1
        %s561 = sand.u32 %s51, 1
        %s562 = scalar_lea.sflag [#allocation3], %s561
        %s563 = sand.u32 %s51, 1
        %s564 = smul.addr %s563, 16
        %s565 = scalar_lea.vmem [#allocation2], %s564
        // Predicated region
        $region77: #{tpu_custom_call.1} parent=75 // pred_check
          %p566 = pneg %p64
        $region78: #{tpu_custom_call.1} parent=75 // pred_check_branch
          %568 = sbr.rel (%p566) target = $region80
        $region79: #{tpu_custom_call.1} parent=75 // pred_region
          %569 = dma.done %s562, 256
        $region80: #{tpu_custom_call.1} parent=75 // pred_fallthru
          _
        %s570 = sand.u32 %s51, 1
        %s571 = scalar_lea.sflag [#allocation3], %s570
        %s572 = sand.u32 %s51, 1
        %s573 = smul.addr %s572, 16
        %s574 = scalar_lea.vmem [#allocation2], %s573
        %p575 = pneg %p64
        %p576 = pneg %p61
        %p577 = scmp.lt.s32.totalorder %s35, 1
        %s578 = scalar_select %p577, %s35, 1
        %s579 = scalar_lea.vmem %s1, %s578
        %p580 = pneg %p90
        %p581 = pneg %p87
        %p582 = scmp.lt.s32.totalorder %s36, 1
        %s583 = scalar_select %p582, %s36, 1
        %s584 = smul.addr %s583, 4
        %s585 = smul.addr %s584, 4
        %s586 = scalar_lea.vmem %s2, %s585
        %p587 = pneg %p116
        %p588 = pneg %p113
        %p589 = scmp.lt.s32.totalorder %s36, 1
        %s590 = scalar_select %p589, %s36, 1
        %s591 = scalar_lea.vmem %s3, %s590
        %p592 = pneg %p142
        %p593 = pneg %p139
        %p594 = scmp.lt.s32.totalorder %s36, 1
        %s595 = scalar_select %p594, %s36, 1
        %s596 = smul.addr %s595, 4
        %s597 = smul.addr %s596, 4
        %s598 = scalar_lea.vmem %s4, %s597
        %p599 = pneg %p168
        %p600 = pneg %p165
        %p601 = scmp.lt.s32.totalorder %s36, 1
        %s602 = scalar_select %p601, %s36, 1
        %s603 = scalar_lea.vmem %s5, %s602
        %p604 = pneg %p194
        %p605 = pneg %p191
        %p606 = scmp.lt.s32.totalorder %s36, 1
        %s607 = scalar_select %p606, %s36, 1
        %s608 = scalar_lea.vmem %s6, %s607
        %p609 = pneg %p220
        %p610 = pneg %p217
        %p611 = scmp.lt.s32.totalorder %s36, 1
        %s612 = scalar_select %p611, %s36, 1
        %s613 = scalar_lea.vmem %s7, %s612
        %p614 = pneg %p246
        %p615 = pneg %p243
        %p616 = scmp.lt.s32.totalorder %s36, 1
        %s617 = scalar_select %p616, %s36, 1
        %s618 = smul.addr %s617, 4
        %s619 = smul.addr %s618, 4
        %s620 = scalar_lea.vmem %s8, %s619
        %p621 = pneg %p272
        %p622 = pneg %p269
        %p623 = scmp.lt.s32.totalorder %s36, 1
        %s624 = scalar_select %p623, %s36, 1
        %s625 = scalar_lea.vmem %s9, %s624
        %p626 = pneg %p298
        %p627 = pneg %p295
        %p628 = scmp.lt.s32.totalorder %s36, 1
        %s629 = scalar_select %p628, %s36, 1
        %s630 = smul.addr %s629, 8
        %s631 = smul.addr %s630, 4
        %s632 = scalar_lea.vmem %s10, %s631
        %p633 = pneg %p324
        %p634 = pneg %p321
        %p635 = scmp.lt.s32.totalorder %s36, 1
        %s636 = scalar_select %p635, %s36, 1
        %s637 = scalar_lea.vmem %s11, %s636
        %p638 = pneg %p350
        %p639 = pneg %p347
        %p640 = scmp.lt.s32.totalorder %s36, 1
        %s641 = scalar_select %p640, %s36, 1
        %s642 = scalar_lea.vmem %s12, %s641
        %p643 = pneg %p376
        %p644 = pneg %p373
        %p645 = scmp.lt.s32.totalorder %s36, 1
        %s646 = scalar_select %p645, %s36, 1
        %s647 = scalar_lea.vmem %s13, %s646
        %p648 = pneg %p402
        %p649 = pneg %p399
        %p650 = pneg %p428
        %p651 = pneg %p425
        %s652 = sand.u32 %s415, 1
        %s653 = scalar_lea.sflag [#allocation4], %s652
        %s654 = sand.u32 %s415, 1
        %s655 = smul.addr %s654, 16
        %s656 = scalar_lea.vmem [#allocation5], %s655
        %p657 = scmp.lt.s32.totalorder %s35, 1
        %s658 = scalar_select %p657, %s35, 1
        %s659 = scalar_lea.vmem %s1, %s658
        %p660 = scmp.lt.s32.totalorder %s36, 1
        %s661 = scalar_select %p660, %s36, 1
        %s662 = smul.addr %s661, 4
        %s663 = smul.addr %s662, 4
        %s664 = scalar_lea.vmem %s2, %s663
        %p665 = scmp.lt.s32.totalorder %s36, 1
        %s666 = scalar_select %p665, %s36, 1
        %s667 = scalar_lea.vmem %s3, %s666
        %p668 = scmp.lt.s32.totalorder %s36, 1
        %s669 = scalar_select %p668, %s36, 1
        %s670 = smul.addr %s669, 4
        %s671 = smul.addr %s670, 4
        %s672 = scalar_lea.vmem %s4, %s671
        %p673 = scmp.lt.s32.totalorder %s36, 1
        %s674 = scalar_select %p673, %s36, 1
        %s675 = scalar_lea.vmem %s5, %s674
        %p676 = scmp.lt.s32.totalorder %s36, 1
        %s677 = scalar_select %p676, %s36, 1
        %s678 = scalar_lea.vmem %s6, %s677
        %p679 = scmp.lt.s32.totalorder %s36, 1
        %s680 = scalar_select %p679, %s36, 1
        %s681 = scalar_lea.vmem %s7, %s680
        %p682 = scmp.lt.s32.totalorder %s36, 1
        %s683 = scalar_select %p682, %s36, 1
        %s684 = smul.addr %s683, 4
        %s685 = smul.addr %s684, 4
        %s686 = scalar_lea.vmem %s8, %s685
        %p687 = scmp.lt.s32.totalorder %s36, 1
        %s688 = scalar_select %p687, %s36, 1
        %s689 = scalar_lea.vmem %s9, %s688
        %p690 = scmp.lt.s32.totalorder %s36, 1
        %s691 = scalar_select %p690, %s36, 1
        %s692 = smul.addr %s691, 8
        %s693 = smul.addr %s692, 4
        %s694 = scalar_lea.vmem %s10, %s693
        %p695 = scmp.lt.s32.totalorder %s36, 1
        %s696 = scalar_select %p695, %s36, 1
        %s697 = scalar_lea.vmem %s11, %s696
        %p698 = scmp.lt.s32.totalorder %s36, 1
        %s699 = scalar_select %p698, %s36, 1
        %s700 = scalar_lea.vmem %s12, %s699
        %p701 = scmp.lt.s32.totalorder %s36, 1
        %s702 = scalar_select %p701, %s36, 1
        %s703 = scalar_lea.vmem %s13, %s702
        %p705 = scmp.eq.s32.totalorder %s36, 0
        // Predicated region
        $region81: #{tpu_custom_call.1} parent=75 // pred_check
          %p706 = pneg %p705
        $region82: #{tpu_custom_call.1} parent=75 // pred_check_branch
          %708 = sbr.rel (%p706) target = $region84
        $region83: #{tpu_custom_call.1} parent=75 // pred_region
          %v709 = vld [vmem:[%s565] sm:$0xff]
          %v710 = vld [vmem:[%s565 + $0x8] sm:$0xff]
          %vm711 = vcmask 261120
          %712 = vst.msk [vmem:[%s656] sm:$0xff] %vm711, %v709
          %713 = vst.msk [vmem:[%s656 + $0x8] sm:$0xff] %vm711, %v710
        $region84: #{tpu_custom_call.1} parent=75 // pred_fallthru
          _
        %v714 = vld [vmem:[%s656] sm:$0xff]
        %v715 = vld [vmem:[%s656 + $0x8] sm:$0xff]
        %v716 = vld [vmem:[%s664] sm:$0xf]
        %v717 = vld [vmem:[%s664 + $0x4] sm:$0xf]
        %v718 = vld [vmem:[%s664 + $0x8] sm:$0xf]
        %v719 = vld [vmem:[%s664 + $0xc] sm:$0xf]
        %v720 = vld [vmem:[%s667] sm:$0x1]
        %v721 = vpack.c.bf16 %v715, %v714
        %v723 = vlaneseq
        %v724 = vshrl.u32 %v723, 7
        %v725 = vsub.s32 0, %v724
        %v726 = vrot.slane %v720, %v725
        %v732 = vunpack.c.l.b16 %v716
        %v733 = vunpack.c.l.b16 %v717
        %v734 = vunpack.c.l.b16 %v718
        %v735 = vunpack.c.l.b16 %v719
        %v736 = vpack.c.b16 %v733, %v732
        %v737 = vpack.c.b16 %v735, %v734
        %vm740 = vcmask 261120
        %v742 = vsel %vm740, %v721, 0
        %744 = vmatprep.subr.bf16.mxu0 0
        %745 = vmatpush1.bf16.msra.mxu0 %v736
        %746 = vmatprep.subr.bf16.mxu0 0
        %747 = vmatpush1.bf16.msra.mxu0 %v737
        %748 = vmatprep.subr.bf16.mxu0 0
        %749 = vmatpush1.bf16.msra.mxu0 0
        %750 = vmatprep.subr.bf16.mxu0 0
        %751 = vmatpush1.bf16.msra.mxu0 0
        %752 = vmatprep.subr.bf16.mxu0 0
        %753 = vmatpush1.bf16.msra.mxu0 0
        %754 = vmatprep.subr.bf16.mxu0 0
        %755 = vmatpush1.bf16.msra.mxu0 0
        %756 = vmatprep.subr.bf16.mxu0 0
        %757 = vmatpush1.bf16.msra.mxu0 0
        %758 = vmatprep.subr.bf16.mxu0 0
        %759 = vmatpush1.bf16.msra.mxu0 0
        %760 = vmatprep.subr.bf16.mxu0 0
        %761 = vmatpush1.bf16.msra.mxu0 0
        %762 = vmatprep.subr.bf16.mxu0 0
        %763 = vmatpush1.bf16.msra.mxu0 0
        %764 = vmatprep.subr.bf16.mxu0 0
        %765 = vmatpush1.bf16.msra.mxu0 0
        %766 = vmatprep.subr.bf16.mxu0 0
        %767 = vmatpush1.bf16.msra.mxu0 0
        %768 = vmatprep.subr.bf16.mxu0 0
        %769 = vmatpush1.bf16.msra.mxu0 0
        %770 = vmatprep.subr.bf16.mxu0 0
        %771 = vmatpush1.bf16.msra.mxu0 0
        %772 = vmatprep.subr.bf16.mxu0 0
        %773 = vmatpush1.bf16.msra.mxu0 0
        %774 = vmatprep.subr.bf16.mxu0 0
        %775 = vmatpush1.bf16.msra.mxu0 0
        %776 = vmatprep.mubr.bf16.mxu0 0
        %777 = vmatmul.mubr.bf16.gmra.mrb[0].mxu0 %v742
        %v778 = vpop.f32.mrb[0].mxu0
        %v779 = vadd.f32 %v726, %v778
        %v780 = vpop.f32.mrb[0].mxu0
        %v781 = vpop.f32.mrb[0].mxu0
        %v782 = vadd.f32 %v726, %v781
        %v783 = vpop.f32.mrb[0].mxu0
        %784 = vdwg.mxu0
        %v785 = vld [vmem:[%s672] sm:$0xf]
        %v786 = vld [vmem:[%s672 + $0x4] sm:$0xf]
        %v787 = vld [vmem:[%s672 + $0x8] sm:$0xf]
        %v788 = vld [vmem:[%s672 + $0xc] sm:$0xf]
        %v789 = vld [vmem:[%s675] sm:$0x1]
        %v790 = vld [vmem:[%s659] sm:$0x1]
        %793 = vrot.lane.b32.xlu0 %v779, 120
        %v794 = vpop.permute.xlu0 %793
        %795 = vrot.lane.b32.xlu0 %v782, 120
        %v796 = vpop.permute.xlu0 %795
        %799 = vrot.lane.b32.xlu0 %v779, 112
        %v800 = vpop.permute.xlu0 %799
        %801 = vrot.lane.b32.xlu0 %v782, 112
        %v802 = vpop.permute.xlu0 %801
        %805 = vrot.lane.b32.xlu0 %v779, 104
        %v806 = vpop.permute.xlu0 %805
        %807 = vrot.lane.b32.xlu0 %v782, 104
        %v808 = vpop.permute.xlu0 %807
        %v811 = vcombine.low %v779, %v800
        %v812 = vcombine.high %v779, %v800
        %v814 = vunpack.c.l.s4 1983009808
        %v815 = vunpack.c.0.s8 %v814
        %v816 = vlaneseq
        %v817 = vshrl.u32 %v816, 7
        %v818 = vsub.s32 %v815, %v817
        %v819 = vrot.slane %v811, %v818
        %v821 = vunpack.c.l.s4 1983009808
        %v822 = vunpack.c.0.s8 %v821
        %v823 = vlaneseq
        %v824 = vshrl.u32 %v823, 7
        %v825 = vsub.s32 %v822, %v824
        %v826 = vrot.slane %v812, %v825
        %v827 = vcombine.low %v794, %v806
        %v828 = vcombine.high %v794, %v806
        %v830 = vunpack.c.l.s4 1983009808
        %v831 = vunpack.c.0.s8 %v830
        %v832 = vlaneseq
        %v833 = vshrl.u32 %v832, 7
        %v834 = vsub.s32 %v831, %v833
        %v835 = vrot.slane %v827, %v834
        %v837 = vunpack.c.l.s4 1983009808
        %v838 = vunpack.c.0.s8 %v837
        %v839 = vlaneseq
        %v840 = vshrl.u32 %v839, 7
        %v841 = vsub.s32 %v838, %v840
        %v842 = vrot.slane %v828, %v841
        %v843 = vcombine.low %v819, %v835
        %v844 = vcombine.high %v819, %v835
        %v846 = vunpack.c.l.s4 1934713408
        %v847 = vunpack.c.0.s8 %v846
        %v848 = vlaneseq
        %v849 = vshrl.u32 %v848, 7
        %v850 = vsub.s32 %v847, %v849
        %v851 = vrot.slane %v843, %v850
        %v853 = vunpack.c.l.s4 1934713408
        %v854 = vunpack.c.0.s8 %v853
        %v855 = vlaneseq
        %v856 = vshrl.u32 %v855, 7
        %v857 = vsub.s32 %v854, %v856
        %v858 = vrot.slane %v844, %v857
        %v859 = vcombine.low %v826, %v842
        %v860 = vcombine.high %v826, %v842
        %v862 = vunpack.c.l.s4 1934713408
        %v863 = vunpack.c.0.s8 %v862
        %v864 = vlaneseq
        %v865 = vshrl.u32 %v864, 7
        %v866 = vsub.s32 %v863, %v865
        %v867 = vrot.slane %v859, %v866
        %v869 = vunpack.c.l.s4 1934713408
        %v870 = vunpack.c.0.s8 %v869
        %v871 = vlaneseq
        %v872 = vshrl.u32 %v871, 7
        %v873 = vsub.s32 %v870, %v872
        %v874 = vrot.slane %v860, %v873
        %v875 = vcombine.high %v851, 0.0
        %v876 = vcombine.high %v858, 0.0
        %v877 = vcombine.high %v867, 0.0
        %v878 = vcombine.high %v874, 0.0
        %v879 = vcombine.low %v782, %v802
        %v880 = vcombine.high %v782, %v802
        %v882 = vunpack.c.l.s4 1983009808
        %v883 = vunpack.c.0.s8 %v882
        %v884 = vlaneseq
        %v885 = vshrl.u32 %v884, 7
        %v886 = vsub.s32 %v883, %v885
        %v887 = vrot.slane %v879, %v886
        %v889 = vunpack.c.l.s4 1983009808
        %v890 = vunpack.c.0.s8 %v889
        %v891 = vlaneseq
        %v892 = vshrl.u32 %v891, 7
        %v893 = vsub.s32 %v890, %v892
        %v894 = vrot.slane %v880, %v893
        %v895 = vcombine.low %v796, %v808
        %v896 = vcombine.high %v796, %v808
        %v898 = vunpack.c.l.s4 1983009808
        %v899 = vunpack.c.0.s8 %v898
        %v900 = vlaneseq
        %v901 = vshrl.u32 %v900, 7
        %v902 = vsub.s32 %v899, %v901
        %v903 = vrot.slane %v895, %v902
        %v905 = vunpack.c.l.s4 1983009808
        %v906 = vunpack.c.0.s8 %v905
        %v907 = vlaneseq
        %v908 = vshrl.u32 %v907, 7
        %v909 = vsub.s32 %v906, %v908
        %v910 = vrot.slane %v896, %v909
        %v911 = vcombine.low %v887, %v903
        %v912 = vcombine.high %v887, %v903
        %v914 = vunpack.c.l.s4 1934713408
        %v915 = vunpack.c.0.s8 %v914
        %v916 = vlaneseq
        %v917 = vshrl.u32 %v916, 7
        %v918 = vsub.s32 %v915, %v917
        %v919 = vrot.slane %v911, %v918
        %v921 = vunpack.c.l.s4 1934713408
        %v922 = vunpack.c.0.s8 %v921
        %v923 = vlaneseq
        %v924 = vshrl.u32 %v923, 7
        %v925 = vsub.s32 %v922, %v924
        %v926 = vrot.slane %v912, %v925
        %v927 = vcombine.low %v894, %v910
        %v928 = vcombine.high %v894, %v910
        %v930 = vunpack.c.l.s4 1934713408
        %v931 = vunpack.c.0.s8 %v930
        %v932 = vlaneseq
        %v933 = vshrl.u32 %v932, 7
        %v934 = vsub.s32 %v931, %v933
        %v935 = vrot.slane %v927, %v934
        %v937 = vunpack.c.l.s4 1934713408
        %v938 = vunpack.c.0.s8 %v937
        %v939 = vlaneseq
        %v940 = vshrl.u32 %v939, 7
        %v941 = vsub.s32 %v938, %v940
        %v942 = vrot.slane %v928, %v941
        %v943 = vcombine.high %v919, 0.0
        %v944 = vcombine.high %v926, 0.0
        %v945 = vcombine.high %v935, 0.0
        %v946 = vcombine.high %v942, 0.0
        %v947 = vcombine.low %v851, %v858
        %v949 = vunpack.c.l.s4 1983009808
        %v950 = vunpack.c.0.s8 %v949
        %v951 = vlaneseq
        %v952 = vshrl.u32 %v951, 7
        %v953 = vsub.s32 %v950, %v952
        %v954 = vrot.slane %v947, %v953
        %v955 = vcombine.low %v875, %v876
        %v957 = vunpack.c.l.s4 1983009808
        %v958 = vunpack.c.0.s8 %v957
        %v959 = vlaneseq
        %v960 = vshrl.u32 %v959, 7
        %v961 = vsub.s32 %v958, %v960
        %v962 = vrot.slane %v955, %v961
        %v963 = vcombine.low %v867, %v874
        %v965 = vunpack.c.l.s4 1983009808
        %v966 = vunpack.c.0.s8 %v965
        %v967 = vlaneseq
        %v968 = vshrl.u32 %v967, 7
        %v969 = vsub.s32 %v966, %v968
        %v970 = vrot.slane %v963, %v969
        %v971 = vcombine.low %v877, %v878
        %v973 = vunpack.c.l.s4 1983009808
        %v974 = vunpack.c.0.s8 %v973
        %v975 = vlaneseq
        %v976 = vshrl.u32 %v975, 7
        %v977 = vsub.s32 %v974, %v976
        %v978 = vrot.slane %v971, %v977
        %v979 = vcombine.low %v954, %v962
        %v980 = vcombine.high %v954, %v962
        %v982 = vunpack.c.l.s4 1934713408
        %v983 = vunpack.c.0.s8 %v982
        %v984 = vlaneseq
        %v985 = vshrl.u32 %v984, 7
        %v986 = vsub.s32 %v983, %v985
        %v987 = vrot.slane %v979, %v986
        %v989 = vunpack.c.l.s4 1934713408
        %v990 = vunpack.c.0.s8 %v989
        %v991 = vlaneseq
        %v992 = vshrl.u32 %v991, 7
        %v993 = vsub.s32 %v990, %v992
        %v994 = vrot.slane %v980, %v993
        %v995 = vcombine.low %v970, %v978
        %v996 = vcombine.high %v970, %v978
        %v998 = vunpack.c.l.s4 1934713408
        %v999 = vunpack.c.0.s8 %v998
        %v1000 = vlaneseq
        %v1001 = vshrl.u32 %v1000, 7
        %v1002 = vsub.s32 %v999, %v1001
        %v1003 = vrot.slane %v995, %v1002
        %v1005 = vunpack.c.l.s4 1934713408
        %v1006 = vunpack.c.0.s8 %v1005
        %v1007 = vlaneseq
        %v1008 = vshrl.u32 %v1007, 7
        %v1009 = vsub.s32 %v1006, %v1008
        %v1010 = vrot.slane %v996, %v1009
        %v1011 = vcombine.low %v987, %v1003
        %v1012 = vcombine.high %v987, %v1003
        %v1013 = vcombine.low %v994, %v1010
        %v1014 = vcombine.high %v994, %v1010
        %v1015 = vcombine.low %v919, %v926
        %v1017 = vunpack.c.l.s4 1983009808
        %v1018 = vunpack.c.0.s8 %v1017
        %v1019 = vlaneseq
        %v1020 = vshrl.u32 %v1019, 7
        %v1021 = vsub.s32 %v1018, %v1020
        %v1022 = vrot.slane %v1015, %v1021
        %v1023 = vcombine.low %v943, %v944
        %v1025 = vunpack.c.l.s4 1983009808
        %v1026 = vunpack.c.0.s8 %v1025
        %v1027 = vlaneseq
        %v1028 = vshrl.u32 %v1027, 7
        %v1029 = vsub.s32 %v1026, %v1028
        %v1030 = vrot.slane %v1023, %v1029
        %v1031 = vcombine.low %v935, %v942
        %v1033 = vunpack.c.l.s4 1983009808
        %v1034 = vunpack.c.0.s8 %v1033
        %v1035 = vlaneseq
        %v1036 = vshrl.u32 %v1035, 7
        %v1037 = vsub.s32 %v1034, %v1036
        %v1038 = vrot.slane %v1031, %v1037
        %v1039 = vcombine.low %v945, %v946
        %v1041 = vunpack.c.l.s4 1983009808
        %v1042 = vunpack.c.0.s8 %v1041
        %v1043 = vlaneseq
        %v1044 = vshrl.u32 %v1043, 7
        %v1045 = vsub.s32 %v1042, %v1044
        %v1046 = vrot.slane %v1039, %v1045
        %v1047 = vcombine.low %v1022, %v1030
        %v1048 = vcombine.high %v1022, %v1030
        %v1050 = vunpack.c.l.s4 1934713408
        %v1051 = vunpack.c.0.s8 %v1050
        %v1052 = vlaneseq
        %v1053 = vshrl.u32 %v1052, 7
        %v1054 = vsub.s32 %v1051, %v1053
        %v1055 = vrot.slane %v1047, %v1054
        %v1057 = vunpack.c.l.s4 1934713408
        %v1058 = vunpack.c.0.s8 %v1057
        %v1059 = vlaneseq
        %v1060 = vshrl.u32 %v1059, 7
        %v1061 = vsub.s32 %v1058, %v1060
        %v1062 = vrot.slane %v1048, %v1061
        %v1063 = vcombine.low %v1038, %v1046
        %v1064 = vcombine.high %v1038, %v1046
        %v1066 = vunpack.c.l.s4 1934713408
        %v1067 = vunpack.c.0.s8 %v1066
        %v1068 = vlaneseq
        %v1069 = vshrl.u32 %v1068, 7
        %v1070 = vsub.s32 %v1067, %v1069
        %v1071 = vrot.slane %v1063, %v1070
        %v1073 = vunpack.c.l.s4 1934713408
        %v1074 = vunpack.c.0.s8 %v1073
        %v1075 = vlaneseq
        %v1076 = vshrl.u32 %v1075, 7
        %v1077 = vsub.s32 %v1074, %v1076
        %v1078 = vrot.slane %v1064, %v1077
        %v1079 = vcombine.low %v1055, %v1071
        %v1080 = vcombine.high %v1055, %v1071
        %v1081 = vcombine.low %v1062, %v1078
        %v1082 = vcombine.high %v1062, %v1078
        %1083 = vrot.lane.b32.xlu0 %v779, 96
        %v1084 = vpop.permute.xlu0 %1083
        %1085 = vrot.lane.b32.xlu0 %v782, 96
        %v1086 = vpop.permute.xlu0 %1085
        %1087 = vrot.lane.b32.xlu0 %v794, 96
        %v1088 = vpop.permute.xlu0 %1087
        %1089 = vrot.lane.b32.xlu0 %v796, 96
        %v1090 = vpop.permute.xlu0 %1089
        %1091 = vrot.lane.b32.xlu0 %v800, 96
        %v1092 = vpop.permute.xlu0 %1091
        %1093 = vrot.lane.b32.xlu0 %v802, 96
        %v1094 = vpop.permute.xlu0 %1093
        %1095 = vrot.lane.b32.xlu0 %v806, 96
        %v1096 = vpop.permute.xlu0 %1095
        %1097 = vrot.lane.b32.xlu0 %v808, 96
        %v1098 = vpop.permute.xlu0 %1097
        %v1107 = vcombine.low %v1084, %v1092
        %v1108 = vcombine.high %v1084, %v1092
        %v1110 = vunpack.c.l.s4 1983009808
        %v1111 = vunpack.c.0.s8 %v1110
        %v1112 = vlaneseq
        %v1113 = vshrl.u32 %v1112, 7
        %v1114 = vsub.s32 %v1111, %v1113
        %v1115 = vrot.slane %v1107, %v1114
        %v1117 = vunpack.c.l.s4 1983009808
        %v1118 = vunpack.c.0.s8 %v1117
        %v1119 = vlaneseq
        %v1120 = vshrl.u32 %v1119, 7
        %v1121 = vsub.s32 %v1118, %v1120
        %v1122 = vrot.slane %v1108, %v1121
        %v1123 = vcombine.low %v1088, %v1096
        %v1124 = vcombine.high %v1088, %v1096
        %v1126 = vunpack.c.l.s4 1983009808
        %v1127 = vunpack.c.0.s8 %v1126
        %v1128 = vlaneseq
        %v1129 = vshrl.u32 %v1128, 7
        %v1130 = vsub.s32 %v1127, %v1129
        %v1131 = vrot.slane %v1123, %v1130
        %v1133 = vunpack.c.l.s4 1983009808
        %v1134 = vunpack.c.0.s8 %v1133
        %v1135 = vlaneseq
        %v1136 = vshrl.u32 %v1135, 7
        %v1137 = vsub.s32 %v1134, %v1136
        %v1138 = vrot.slane %v1124, %v1137
        %v1139 = vcombine.low %v1115, %v1131
        %v1140 = vcombine.high %v1115, %v1131
        %v1142 = vunpack.c.l.s4 1934713408
        %v1143 = vunpack.c.0.s8 %v1142
        %v1144 = vlaneseq
        %v1145 = vshrl.u32 %v1144, 7
        %v1146 = vsub.s32 %v1143, %v1145
        %v1147 = vrot.slane %v1139, %v1146
        %v1149 = vunpack.c.l.s4 1934713408
        %v1150 = vunpack.c.0.s8 %v1149
        %v1151 = vlaneseq
        %v1152 = vshrl.u32 %v1151, 7
        %v1153 = vsub.s32 %v1150, %v1152
        %v1154 = vrot.slane %v1140, %v1153
        %v1155 = vcombine.low %v1122, %v1138
        %v1156 = vcombine.high %v1122, %v1138
        %v1158 = vunpack.c.l.s4 1934713408
        %v1159 = vunpack.c.0.s8 %v1158
        %v1160 = vlaneseq
        %v1161 = vshrl.u32 %v1160, 7
        %v1162 = vsub.s32 %v1159, %v1161
        %v1163 = vrot.slane %v1155, %v1162
        %v1165 = vunpack.c.l.s4 1934713408
        %v1166 = vunpack.c.0.s8 %v1165
        %v1167 = vlaneseq
        %v1168 = vshrl.u32 %v1167, 7
        %v1169 = vsub.s32 %v1166, %v1168
        %v1170 = vrot.slane %v1156, %v1169
        %v1171 = vcombine.high %v1147, 0.0
        %v1172 = vcombine.high %v1154, 0.0
        %v1173 = vcombine.high %v1163, 0.0
        %v1174 = vcombine.high %v1170, 0.0
        %v1175 = vcombine.low %v1086, %v1094
        %v1176 = vcombine.high %v1086, %v1094
        %v1178 = vunpack.c.l.s4 1983009808
        %v1179 = vunpack.c.0.s8 %v1178
        %v1180 = vlaneseq
        %v1181 = vshrl.u32 %v1180, 7
        %v1182 = vsub.s32 %v1179, %v1181
        %v1183 = vrot.slane %v1175, %v1182
        %v1185 = vunpack.c.l.s4 1983009808
        %v1186 = vunpack.c.0.s8 %v1185
        %v1187 = vlaneseq
        %v1188 = vshrl.u32 %v1187, 7
        %v1189 = vsub.s32 %v1186, %v1188
        %v1190 = vrot.slane %v1176, %v1189
        %v1191 = vcombine.low %v1090, %v1098
        %v1192 = vcombine.high %v1090, %v1098
        %v1194 = vunpack.c.l.s4 1983009808
        %v1195 = vunpack.c.0.s8 %v1194
        %v1196 = vlaneseq
        %v1197 = vshrl.u32 %v1196, 7
        %v1198 = vsub.s32 %v1195, %v1197
        %v1199 = vrot.slane %v1191, %v1198
        %v1201 = vunpack.c.l.s4 1983009808
        %v1202 = vunpack.c.0.s8 %v1201
        %v1203 = vlaneseq
        %v1204 = vshrl.u32 %v1203, 7
        %v1205 = vsub.s32 %v1202, %v1204
        %v1206 = vrot.slane %v1192, %v1205
        %v1207 = vcombine.low %v1183, %v1199
        %v1208 = vcombine.high %v1183, %v1199
        %v1210 = vunpack.c.l.s4 1934713408
        %v1211 = vunpack.c.0.s8 %v1210
        %v1212 = vlaneseq
        %v1213 = vshrl.u32 %v1212, 7
        %v1214 = vsub.s32 %v1211, %v1213
        %v1215 = vrot.slane %v1207, %v1214
        %v1217 = vunpack.c.l.s4 1934713408
        %v1218 = vunpack.c.0.s8 %v1217
        %v1219 = vlaneseq
        %v1220 = vshrl.u32 %v1219, 7
        %v1221 = vsub.s32 %v1218, %v1220
        %v1222 = vrot.slane %v1208, %v1221
        %v1223 = vcombine.low %v1190, %v1206
        %v1224 = vcombine.high %v1190, %v1206
        %v1226 = vunpack.c.l.s4 1934713408
        %v1227 = vunpack.c.0.s8 %v1226
        %v1228 = vlaneseq
        %v1229 = vshrl.u32 %v1228, 7
        %v1230 = vsub.s32 %v1227, %v1229
        %v1231 = vrot.slane %v1223, %v1230
        %v1233 = vunpack.c.l.s4 1934713408
        %v1234 = vunpack.c.0.s8 %v1233
        %v1235 = vlaneseq
        %v1236 = vshrl.u32 %v1235, 7
        %v1237 = vsub.s32 %v1234, %v1236
        %v1238 = vrot.slane %v1224, %v1237
        %v1239 = vcombine.high %v1215, 0.0
        %v1240 = vcombine.high %v1222, 0.0
        %v1241 = vcombine.high %v1231, 0.0
        %v1242 = vcombine.high %v1238, 0.0
        %v1243 = vcombine.low %v1147, %v1154
        %v1245 = vunpack.c.l.s4 1983009808
        %v1246 = vunpack.c.0.s8 %v1245
        %v1247 = vlaneseq
        %v1248 = vshrl.u32 %v1247, 7
        %v1249 = vsub.s32 %v1246, %v1248
        %v1250 = vrot.slane %v1243, %v1249
        %v1251 = vcombine.low %v1171, %v1172
        %v1253 = vunpack.c.l.s4 1983009808
        %v1254 = vunpack.c.0.s8 %v1253
        %v1255 = vlaneseq
        %v1256 = vshrl.u32 %v1255, 7
        %v1257 = vsub.s32 %v1254, %v1256
        %v1258 = vrot.slane %v1251, %v1257
        %v1259 = vcombine.low %v1163, %v1170
        %v1261 = vunpack.c.l.s4 1983009808
        %v1262 = vunpack.c.0.s8 %v1261
        %v1263 = vlaneseq
        %v1264 = vshrl.u32 %v1263, 7
        %v1265 = vsub.s32 %v1262, %v1264
        %v1266 = vrot.slane %v1259, %v1265
        %v1267 = vcombine.low %v1173, %v1174
        %v1269 = vunpack.c.l.s4 1983009808
        %v1270 = vunpack.c.0.s8 %v1269
        %v1271 = vlaneseq
        %v1272 = vshrl.u32 %v1271, 7
        %v1273 = vsub.s32 %v1270, %v1272
        %v1274 = vrot.slane %v1267, %v1273
        %v1275 = vcombine.low %v1250, %v1258
        %v1276 = vcombine.high %v1250, %v1258
        %v1278 = vunpack.c.l.s4 1934713408
        %v1279 = vunpack.c.0.s8 %v1278
        %v1280 = vlaneseq
        %v1281 = vshrl.u32 %v1280, 7
        %v1282 = vsub.s32 %v1279, %v1281
        %v1283 = vrot.slane %v1275, %v1282
        %v1285 = vunpack.c.l.s4 1934713408
        %v1286 = vunpack.c.0.s8 %v1285
        %v1287 = vlaneseq
        %v1288 = vshrl.u32 %v1287, 7
        %v1289 = vsub.s32 %v1286, %v1288
        %v1290 = vrot.slane %v1276, %v1289
        %v1291 = vcombine.low %v1266, %v1274
        %v1292 = vcombine.high %v1266, %v1274
        %v1294 = vunpack.c.l.s4 1934713408
        %v1295 = vunpack.c.0.s8 %v1294
        %v1296 = vlaneseq
        %v1297 = vshrl.u32 %v1296, 7
        %v1298 = vsub.s32 %v1295, %v1297
        %v1299 = vrot.slane %v1291, %v1298
        %v1301 = vunpack.c.l.s4 1934713408
        %v1302 = vunpack.c.0.s8 %v1301
        %v1303 = vlaneseq
        %v1304 = vshrl.u32 %v1303, 7
        %v1305 = vsub.s32 %v1302, %v1304
        %v1306 = vrot.slane %v1292, %v1305
        %v1307 = vcombine.low %v1283, %v1299
        %v1308 = vcombine.high %v1283, %v1299
        %v1309 = vcombine.low %v1290, %v1306
        %v1310 = vcombine.high %v1290, %v1306
        %v1311 = vcombine.low %v1215, %v1222
        %v1313 = vunpack.c.l.s4 1983009808
        %v1314 = vunpack.c.0.s8 %v1313
        %v1315 = vlaneseq
        %v1316 = vshrl.u32 %v1315, 7
        %v1317 = vsub.s32 %v1314, %v1316
        %v1318 = vrot.slane %v1311, %v1317
        %v1319 = vcombine.low %v1239, %v1240
        %v1321 = vunpack.c.l.s4 1983009808
        %v1322 = vunpack.c.0.s8 %v1321
        %v1323 = vlaneseq
        %v1324 = vshrl.u32 %v1323, 7
        %v1325 = vsub.s32 %v1322, %v1324
        %v1326 = vrot.slane %v1319, %v1325
        %v1327 = vcombine.low %v1231, %v1238
        %v1329 = vunpack.c.l.s4 1983009808
        %v1330 = vunpack.c.0.s8 %v1329
        %v1331 = vlaneseq
        %v1332 = vshrl.u32 %v1331, 7
        %v1333 = vsub.s32 %v1330, %v1332
        %v1334 = vrot.slane %v1327, %v1333
        %v1335 = vcombine.low %v1241, %v1242
        %v1337 = vunpack.c.l.s4 1983009808
        %v1338 = vunpack.c.0.s8 %v1337
        %v1339 = vlaneseq
        %v1340 = vshrl.u32 %v1339, 7
        %v1341 = vsub.s32 %v1338, %v1340
        %v1342 = vrot.slane %v1335, %v1341
        %v1343 = vcombine.low %v1318, %v1326
        %v1344 = vcombine.high %v1318, %v1326
        %v1346 = vunpack.c.l.s4 1934713408
        %v1347 = vunpack.c.0.s8 %v1346
        %v1348 = vlaneseq
        %v1349 = vshrl.u32 %v1348, 7
        %v1350 = vsub.s32 %v1347, %v1349
        %v1351 = vrot.slane %v1343, %v1350
        %v1353 = vunpack.c.l.s4 1934713408
        %v1354 = vunpack.c.0.s8 %v1353
        %v1355 = vlaneseq
        %v1356 = vshrl.u32 %v1355, 7
        %v1357 = vsub.s32 %v1354, %v1356
        %v1358 = vrot.slane %v1344, %v1357
        %v1359 = vcombine.low %v1334, %v1342
        %v1360 = vcombine.high %v1334, %v1342
        %v1362 = vunpack.c.l.s4 1934713408
        %v1363 = vunpack.c.0.s8 %v1362
        %v1364 = vlaneseq
        %v1365 = vshrl.u32 %v1364, 7
        %v1366 = vsub.s32 %v1363, %v1365
        %v1367 = vrot.slane %v1359, %v1366
        %v1369 = vunpack.c.l.s4 1934713408
        %v1370 = vunpack.c.0.s8 %v1369
        %v1371 = vlaneseq
        %v1372 = vshrl.u32 %v1371, 7
        %v1373 = vsub.s32 %v1370, %v1372
        %v1374 = vrot.slane %v1360, %v1373
        %v1375 = vcombine.low %v1351, %v1367
        %v1376 = vcombine.high %v1351, %v1367
        %v1377 = vcombine.low %v1358, %v1374
        %v1378 = vcombine.high %v1358, %v1374
        %1379 = vrot.lane.b32.xlu0 %v779, 64
        %v1380 = vpop.permute.xlu0 %1379
        %1381 = vrot.lane.b32.xlu0 %v782, 64
        %v1382 = vpop.permute.xlu0 %1381
        %1383 = vrot.lane.b32.xlu0 %v794, 64
        %v1384 = vpop.permute.xlu0 %1383
        %1385 = vrot.lane.b32.xlu0 %v796, 64
        %v1386 = vpop.permute.xlu0 %1385
        %1387 = vrot.lane.b32.xlu0 %v800, 64
        %v1388 = vpop.permute.xlu0 %1387
        %1389 = vrot.lane.b32.xlu0 %v802, 64
        %v1390 = vpop.permute.xlu0 %1389
        %1391 = vrot.lane.b32.xlu0 %v806, 64
        %v1392 = vpop.permute.xlu0 %1391
        %1393 = vrot.lane.b32.xlu0 %v808, 64
        %v1394 = vpop.permute.xlu0 %1393
        %v1403 = vcombine.low %v1380, %v1388
        %v1404 = vcombine.high %v1380, %v1388
        %v1406 = vunpack.c.l.s4 1983009808
        %v1407 = vunpack.c.0.s8 %v1406
        %v1408 = vlaneseq
        %v1409 = vshrl.u32 %v1408, 7
        %v1410 = vsub.s32 %v1407, %v1409
        %v1411 = vrot.slane %v1403, %v1410
        %v1413 = vunpack.c.l.s4 1983009808
        %v1414 = vunpack.c.0.s8 %v1413
        %v1415 = vlaneseq
        %v1416 = vshrl.u32 %v1415, 7
        %v1417 = vsub.s32 %v1414, %v1416
        %v1418 = vrot.slane %v1404, %v1417
        %v1419 = vcombine.low %v1384, %v1392
        %v1420 = vcombine.high %v1384, %v1392
        %v1422 = vunpack.c.l.s4 1983009808
        %v1423 = vunpack.c.0.s8 %v1422
        %v1424 = vlaneseq
        %v1425 = vshrl.u32 %v1424, 7
        %v1426 = vsub.s32 %v1423, %v1425
        %v1427 = vrot.slane %v1419, %v1426
        %v1429 = vunpack.c.l.s4 1983009808
        %v1430 = vunpack.c.0.s8 %v1429
        %v1431 = vlaneseq
        %v1432 = vshrl.u32 %v1431, 7
        %v1433 = vsub.s32 %v1430, %v1432
        %v1434 = vrot.slane %v1420, %v1433
        %v1435 = vcombine.low %v1411, %v1427
        %v1436 = vcombine.high %v1411, %v1427
        %v1438 = vunpack.c.l.s4 1934713408
        %v1439 = vunpack.c.0.s8 %v1438
        %v1440 = vlaneseq
        %v1441 = vshrl.u32 %v1440, 7
        %v1442 = vsub.s32 %v1439, %v1441
        %v1443 = vrot.slane %v1435, %v1442
        %v1445 = vunpack.c.l.s4 1934713408
        %v1446 = vunpack.c.0.s8 %v1445
        %v1447 = vlaneseq
        %v1448 = vshrl.u32 %v1447, 7
        %v1449 = vsub.s32 %v1446, %v1448
        %v1450 = vrot.slane %v1436, %v1449
        %v1451 = vcombine.low %v1418, %v1434
        %v1452 = vcombine.high %v1418, %v1434
        %v1454 = vunpack.c.l.s4 1934713408
        %v1455 = vunpack.c.0.s8 %v1454
        %v1456 = vlaneseq
        %v1457 = vshrl.u32 %v1456, 7
        %v1458 = vsub.s32 %v1455, %v1457
        %v1459 = vrot.slane %v1451, %v1458
        %v1461 = vunpack.c.l.s4 1934713408
        %v1462 = vunpack.c.0.s8 %v1461
        %v1463 = vlaneseq
        %v1464 = vshrl.u32 %v1463, 7
        %v1465 = vsub.s32 %v1462, %v1464
        %v1466 = vrot.slane %v1452, %v1465
        %v1467 = vcombine.high %v1443, 0.0
        %v1468 = vcombine.high %v1450, 0.0
        %v1469 = vcombine.high %v1459, 0.0
        %v1470 = vcombine.high %v1466, 0.0
        %v1471 = vcombine.low %v1382, %v1390
        %v1472 = vcombine.high %v1382, %v1390
        %v1474 = vunpack.c.l.s4 1983009808
        %v1475 = vunpack.c.0.s8 %v1474
        %v1476 = vlaneseq
        %v1477 = vshrl.u32 %v1476, 7
        %v1478 = vsub.s32 %v1475, %v1477
        %v1479 = vrot.slane %v1471, %v1478
        %v1481 = vunpack.c.l.s4 1983009808
        %v1482 = vunpack.c.0.s8 %v1481
        %v1483 = vlaneseq
        %v1484 = vshrl.u32 %v1483, 7
        %v1485 = vsub.s32 %v1482, %v1484
        %v1486 = vrot.slane %v1472, %v1485
        %v1487 = vcombine.low %v1386, %v1394
        %v1488 = vcombine.high %v1386, %v1394
        %v1490 = vunpack.c.l.s4 1983009808
        %v1491 = vunpack.c.0.s8 %v1490
        %v1492 = vlaneseq
        %v1493 = vshrl.u32 %v1492, 7
        %v1494 = vsub.s32 %v1491, %v1493
        %v1495 = vrot.slane %v1487, %v1494
        %v1497 = vunpack.c.l.s4 1983009808
        %v1498 = vunpack.c.0.s8 %v1497
        %v1499 = vlaneseq
        %v1500 = vshrl.u32 %v1499, 7
        %v1501 = vsub.s32 %v1498, %v1500
        %v1502 = vrot.slane %v1488, %v1501
        %v1503 = vcombine.low %v1479, %v1495
        %v1504 = vcombine.high %v1479, %v1495
        %v1506 = vunpack.c.l.s4 1934713408
        %v1507 = vunpack.c.0.s8 %v1506
        %v1508 = vlaneseq
        %v1509 = vshrl.u32 %v1508, 7
        %v1510 = vsub.s32 %v1507, %v1509
        %v1511 = vrot.slane %v1503, %v1510
        %v1513 = vunpack.c.l.s4 1934713408
        %v1514 = vunpack.c.0.s8 %v1513
        %v1515 = vlaneseq
        %v1516 = vshrl.u32 %v1515, 7
        %v1517 = vsub.s32 %v1514, %v1516
        %v1518 = vrot.slane %v1504, %v1517
        %v1519 = vcombine.low %v1486, %v1502
        %v1520 = vcombine.high %v1486, %v1502
        %v1522 = vunpack.c.l.s4 1934713408
        %v1523 = vunpack.c.0.s8 %v1522
        %v1524 = vlaneseq
        %v1525 = vshrl.u32 %v1524, 7
        %v1526 = vsub.s32 %v1523, %v1525
        %v1527 = vrot.slane %v1519, %v1526
        %v1529 = vunpack.c.l.s4 1934713408
        %v1530 = vunpack.c.0.s8 %v1529
        %v1531 = vlaneseq
        %v1532 = vshrl.u32 %v1531, 7
        %v1533 = vsub.s32 %v1530, %v1532
        %v1534 = vrot.slane %v1520, %v1533
        %v1535 = vcombine.high %v1511, 0.0
        %v1536 = vcombine.high %v1518, 0.0
        %v1537 = vcombine.high %v1527, 0.0
        %v1538 = vcombine.high %v1534, 0.0
        %v1539 = vcombine.low %v1443, %v1450
        %v1541 = vunpack.c.l.s4 1983009808
        %v1542 = vunpack.c.0.s8 %v1541
        %v1543 = vlaneseq
        %v1544 = vshrl.u32 %v1543, 7
        %v1545 = vsub.s32 %v1542, %v1544
        %v1546 = vrot.slane %v1539, %v1545
        %v1547 = vcombine.low %v1467, %v1468
        %v1549 = vunpack.c.l.s4 1983009808
        %v1550 = vunpack.c.0.s8 %v1549
        %v1551 = vlaneseq
        %v1552 = vshrl.u32 %v1551, 7
        %v1553 = vsub.s32 %v1550, %v1552
        %v1554 = vrot.slane %v1547, %v1553
        %v1555 = vcombine.low %v1459, %v1466
        %v1557 = vunpack.c.l.s4 1983009808
        %v1558 = vunpack.c.0.s8 %v1557
        %v1559 = vlaneseq
        %v1560 = vshrl.u32 %v1559, 7
        %v1561 = vsub.s32 %v1558, %v1560
        %v1562 = vrot.slane %v1555, %v1561
        %v1563 = vcombine.low %v1469, %v1470
        %v1565 = vunpack.c.l.s4 1983009808
        %v1566 = vunpack.c.0.s8 %v1565
        %v1567 = vlaneseq
        %v1568 = vshrl.u32 %v1567, 7
        %v1569 = vsub.s32 %v1566, %v1568
        %v1570 = vrot.slane %v1563, %v1569
        %v1571 = vcombine.low %v1546, %v1554
        %v1572 = vcombine.high %v1546, %v1554
        %v1574 = vunpack.c.l.s4 1934713408
        %v1575 = vunpack.c.0.s8 %v1574
        %v1576 = vlaneseq
        %v1577 = vshrl.u32 %v1576, 7
        %v1578 = vsub.s32 %v1575, %v1577
        %v1579 = vrot.slane %v1571, %v1578
        %v1581 = vunpack.c.l.s4 1934713408
        %v1582 = vunpack.c.0.s8 %v1581
        %v1583 = vlaneseq
        %v1584 = vshrl.u32 %v1583, 7
        %v1585 = vsub.s32 %v1582, %v1584
        %v1586 = vrot.slane %v1572, %v1585
        %v1587 = vcombine.low %v1562, %v1570
        %v1588 = vcombine.high %v1562, %v1570
        %v1590 = vunpack.c.l.s4 1934713408
        %v1591 = vunpack.c.0.s8 %v1590
        %v1592 = vlaneseq
        %v1593 = vshrl.u32 %v1592, 7
        %v1594 = vsub.s32 %v1591, %v1593
        %v1595 = vrot.slane %v1587, %v1594
        %v1597 = vunpack.c.l.s4 1934713408
        %v1598 = vunpack.c.0.s8 %v1597
        %v1599 = vlaneseq
        %v1600 = vshrl.u32 %v1599, 7
        %v1601 = vsub.s32 %v1598, %v1600
        %v1602 = vrot.slane %v1588, %v1601
        %v1603 = vcombine.low %v1579, %v1595
        %v1604 = vcombine.high %v1579, %v1595
        %v1605 = vcombine.low %v1586, %v1602
        %v1606 = vcombine.high %v1586, %v1602
        %v1607 = vcombine.low %v1511, %v1518
        %v1609 = vunpack.c.l.s4 1983009808
        %v1610 = vunpack.c.0.s8 %v1609
        %v1611 = vlaneseq
        %v1612 = vshrl.u32 %v1611, 7
        %v1613 = vsub.s32 %v1610, %v1612
        %v1614 = vrot.slane %v1607, %v1613
        %v1615 = vcombine.low %v1535, %v1536
        %v1617 = vunpack.c.l.s4 1983009808
        %v1618 = vunpack.c.0.s8 %v1617
        %v1619 = vlaneseq
        %v1620 = vshrl.u32 %v1619, 7
        %v1621 = vsub.s32 %v1618, %v1620
        %v1622 = vrot.slane %v1615, %v1621
        %v1623 = vcombine.low %v1527, %v1534
        %v1625 = vunpack.c.l.s4 1983009808
        %v1626 = vunpack.c.0.s8 %v1625
        %v1627 = vlaneseq
        %v1628 = vshrl.u32 %v1627, 7
        %v1629 = vsub.s32 %v1626, %v1628
        %v1630 = vrot.slane %v1623, %v1629
        %v1631 = vcombine.low %v1537, %v1538
        %v1633 = vunpack.c.l.s4 1983009808
        %v1634 = vunpack.c.0.s8 %v1633
        %v1635 = vlaneseq
        %v1636 = vshrl.u32 %v1635, 7
        %v1637 = vsub.s32 %v1634, %v1636
        %v1638 = vrot.slane %v1631, %v1637
        %v1639 = vcombine.low %v1614, %v1622
        %v1640 = vcombine.high %v1614, %v1622
        %v1642 = vunpack.c.l.s4 1934713408
        %v1643 = vunpack.c.0.s8 %v1642
        %v1644 = vlaneseq
        %v1645 = vshrl.u32 %v1644, 7
        %v1646 = vsub.s32 %v1643, %v1645
        %v1647 = vrot.slane %v1639, %v1646
        %v1649 = vunpack.c.l.s4 1934713408
        %v1650 = vunpack.c.0.s8 %v1649
        %v1651 = vlaneseq
        %v1652 = vshrl.u32 %v1651, 7
        %v1653 = vsub.s32 %v1650, %v1652
        %v1654 = vrot.slane %v1640, %v1653
        %v1655 = vcombine.low %v1630, %v1638
        %v1656 = vcombine.high %v1630, %v1638
        %v1658 = vunpack.c.l.s4 1934713408
        %v1659 = vunpack.c.0.s8 %v1658
        %v1660 = vlaneseq
        %v1661 = vshrl.u32 %v1660, 7
        %v1662 = vsub.s32 %v1659, %v1661
        %v1663 = vrot.slane %v1655, %v1662
        %v1665 = vunpack.c.l.s4 1934713408
        %v1666 = vunpack.c.0.s8 %v1665
        %v1667 = vlaneseq
        %v1668 = vshrl.u32 %v1667, 7
        %v1669 = vsub.s32 %v1666, %v1668
        %v1670 = vrot.slane %v1656, %v1669
        %v1671 = vcombine.low %v1647, %v1663
        %v1672 = vcombine.high %v1647, %v1663
        %v1673 = vcombine.low %v1654, %v1670
        %v1674 = vcombine.high %v1654, %v1670
        %v1675 = vpack.c.bf16 %v1079, %v1011
        %v1676 = vpack.c.bf16 %v1080, %v1012
        %v1677 = vpack.c.bf16 %v1081, %v1013
        %v1678 = vpack.c.bf16 %v1082, %v1014
        %v1679 = vpack.c.bf16 %v1375, %v1307
        %v1680 = vpack.c.bf16 %v1376, %v1308
        %v1681 = vpack.c.bf16 %v1377, %v1309
        %v1682 = vpack.c.bf16 %v1378, %v1310
        %vm1683 = vcmask 64512
        %v1685 = vsel %vm1683, %v1675, 0
        %v1688 = vsel %vm1683, %v1679, 0
        %1690 = vmatprep.subr.bf16.mxu0 0
        %1691 = vmatpush1.bf16.xpose.msra.mxu0 %v1688
        %1692 = vmatprep.subr.bf16.mxu0 0
        %1693 = vmatpush1.bf16.xpose.msra.mxu0 0
        %1694 = vmatprep.subr.bf16.mxu0 0
        %1695 = vmatpush1.bf16.xpose.msra.mxu0 0
        %1696 = vmatprep.subr.bf16.mxu0 0
        %1697 = vmatpush1.bf16.xpose.msra.mxu0 0
        %1698 = vmatprep.subr.bf16.mxu0 0
        %1699 = vmatpush1.bf16.xpose.msra.mxu0 0
        %1700 = vmatprep.subr.bf16.mxu0 0
        %1701 = vmatpush1.bf16.xpose.msra.mxu0 0
        %1702 = vmatprep.subr.bf16.mxu0 0
        %1703 = vmatpush1.bf16.xpose.msra.mxu0 0
        %1704 = vmatprep.subr.bf16.mxu0 0
        %1705 = vmatpush1.bf16.xpose.msra.mxu0 0
        %1706 = vmatprep.subr.bf16.mxu0 0
        %1707 = vmatpush1.bf16.xpose.msra.mxu0 0
        %1708 = vmatprep.subr.bf16.mxu0 0
        %1709 = vmatpush1.bf16.xpose.msra.mxu0 0
        %1710 = vmatprep.subr.bf16.mxu0 0
        %1711 = vmatpush1.bf16.xpose.msra.mxu0 0
        %1712 = vmatprep.subr.bf16.mxu0 0
        %1713 = vmatpush1.bf16.xpose.msra.mxu0 0
        %1714 = vmatprep.subr.bf16.mxu0 0
        %1715 = vmatpush1.bf16.xpose.msra.mxu0 0
        %1716 = vmatprep.subr.bf16.mxu0 0
        %1717 = vmatpush1.bf16.xpose.msra.mxu0 0
        %1718 = vmatprep.subr.bf16.mxu0 0
        %1719 = vmatpush1.bf16.xpose.msra.mxu0 0
        %1720 = vmatprep.subr.bf16.mxu0 0
        %1721 = vmatpush1.bf16.xpose.msra.mxu0 0
        %1722 = vmatprep.mubr.bf16.mxu0 0
        %1723 = vmatmul.mubr.bf16.gmra.mrb[0].mxu0 %v1685
        %v1724 = vpop.f32.mrb[0].mxu0
        %v1725 = vadd.f32 0.0, %v1724
        %v1726 = vpop.f32.mrb[0].mxu0
        %v1727 = vpop.f32.mrb[0].mxu0
        %v1728 = vadd.f32 0.0, %v1727
        %v1729 = vpop.f32.mrb[0].mxu0
        %1730 = vdwg.mxu0
        %v1732 = vsel %vm1683, %v1676, 0
        %v1735 = vsel %vm1683, %v1680, 0
        %1737 = vmatprep.subr.bf16.mxu0 0
        %1738 = vmatpush1.bf16.xpose.msra.mxu0 %v1735
        %1739 = vmatprep.subr.bf16.mxu0 0
        %1740 = vmatpush1.bf16.xpose.msra.mxu0 0
        %1741 = vmatprep.subr.bf16.mxu0 0
        %1742 = vmatpush1.bf16.xpose.msra.mxu0 0
        %1743 = vmatprep.subr.bf16.mxu0 0
        %1744 = vmatpush1.bf16.xpose.msra.mxu0 0
        %1745 = vmatprep.subr.bf16.mxu0 0
        %1746 = vmatpush1.bf16.xpose.msra.mxu0 0
        %1747 = vmatprep.subr.bf16.mxu0 0
        %1748 = vmatpush1.bf16.xpose.msra.mxu0 0
        %1749 = vmatprep.subr.bf16.mxu0 0
        %1750 = vmatpush1.bf16.xpose.msra.mxu0 0
        %1751 = vmatprep.subr.bf16.mxu0 0
        %1752 = vmatpush1.bf16.xpose.msra.mxu0 0
        %1753 = vmatprep.subr.bf16.mxu0 0
        %1754 = vmatpush1.bf16.xpose.msra.mxu0 0
        %1755 = vmatprep.subr.bf16.mxu0 0
        %1756 = vmatpush1.bf16.xpose.msra.mxu0 0
        %1757 = vmatprep.subr.bf16.mxu0 0
        %1758 = vmatpush1.bf16.xpose.msra.mxu0 0
        %1759 = vmatprep.subr.bf16.mxu0 0
        %1760 = vmatpush1.bf16.xpose.msra.mxu0 0
        %1761 = vmatprep.subr.bf16.mxu0 0
        %1762 = vmatpush1.bf16.xpose.msra.mxu0 0
        %1763 = vmatprep.subr.bf16.mxu0 0
        %1764 = vmatpush1.bf16.xpose.msra.mxu0 0
        %1765 = vmatprep.subr.bf16.mxu0 0
        %1766 = vmatpush1.bf16.xpose.msra.mxu0 0
        %1767 = vmatprep.subr.bf16.mxu0 0
        %1768 = vmatpush1.bf16.xpose.msra.mxu0 0
        %1769 = vmatprep.mubr.bf16.mxu0 0
        %1770 = vmatmul.mubr.bf16.gmra.mrb[0].mxu0 %v1732
        %v1771 = vpop.f32.mrb[0].mxu0
        %v1772 = vadd.f32 0.0, %v1771
        %v1773 = vpop.f32.mrb[0].mxu0
        %v1774 = vpop.f32.mrb[0].mxu0
        %v1775 = vadd.f32 0.0, %v1774
        %v1776 = vpop.f32.mrb[0].mxu0
        %1777 = vdwg.mxu0
        %v1779 = vsel %vm1683, %v1677, 0
        %v1782 = vsel %vm1683, %v1681, 0
        %1784 = vmatprep.subr.bf16.mxu0 0
        %1785 = vmatpush1.bf16.xpose.msra.mxu0 %v1782
        %1786 = vmatprep.subr.bf16.mxu0 0
        %1787 = vmatpush1.bf16.xpose.msra.mxu0 0
        %1788 = vmatprep.subr.bf16.mxu0 0
        %1789 = vmatpush1.bf16.xpose.msra.mxu0 0
        %1790 = vmatprep.subr.bf16.mxu0 0
        %1791 = vmatpush1.bf16.xpose.msra.mxu0 0
        %1792 = vmatprep.subr.bf16.mxu0 0
        %1793 = vmatpush1.bf16.xpose.msra.mxu0 0
        %1794 = vmatprep.subr.bf16.mxu0 0
        %1795 = vmatpush1.bf16.xpose.msra.mxu0 0
        %1796 = vmatprep.subr.bf16.mxu0 0
        %1797 = vmatpush1.bf16.xpose.msra.mxu0 0
        %1798 = vmatprep.subr.bf16.mxu0 0
        %1799 = vmatpush1.bf16.xpose.msra.mxu0 0
        %1800 = vmatprep.subr.bf16.mxu0 0
        %1801 = vmatpush1.bf16.xpose.msra.mxu0 0
        %1802 = vmatprep.subr.bf16.mxu0 0
        %1803 = vmatpush1.bf16.xpose.msra.mxu0 0
        %1804 = vmatprep.subr.bf16.mxu0 0
        %1805 = vmatpush1.bf16.xpose.msra.mxu0 0
        %1806 = vmatprep.subr.bf16.mxu0 0
        %1807 = vmatpush1.bf16.xpose.msra.mxu0 0
        %1808 = vmatprep.subr.bf16.mxu0 0
        %1809 = vmatpush1.bf16.xpose.msra.mxu0 0
        %1810 = vmatprep.subr.bf16.mxu0 0
        %1811 = vmatpush1.bf16.xpose.msra.mxu0 0
        %1812 = vmatprep.subr.bf16.mxu0 0
        %1813 = vmatpush1.bf16.xpose.msra.mxu0 0
        %1814 = vmatprep.subr.bf16.mxu0 0
        %1815 = vmatpush1.bf16.xpose.msra.mxu0 0
        %1816 = vmatprep.mubr.bf16.mxu0 0
        %1817 = vmatmul.mubr.bf16.gmra.mrb[0].mxu0 %v1779
        %v1818 = vpop.f32.mrb[0].mxu0
        %v1819 = vadd.f32 0.0, %v1818
        %v1820 = vpop.f32.mrb[0].mxu0
        %v1821 = vpop.f32.mrb[0].mxu0
        %v1822 = vadd.f32 0.0, %v1821
        %v1823 = vpop.f32.mrb[0].mxu0
        %1824 = vdwg.mxu0
        %v1826 = vsel %vm1683, %v1678, 0
        %v1829 = vsel %vm1683, %v1682, 0
        %1831 = vmatprep.subr.bf16.mxu0 0
        %1832 = vmatpush1.bf16.xpose.msra.mxu0 %v1829
        %1833 = vmatprep.subr.bf16.mxu0 0
        %1834 = vmatpush1.bf16.xpose.msra.mxu0 0
        %1835 = vmatprep.subr.bf16.mxu0 0
        %1836 = vmatpush1.bf16.xpose.msra.mxu0 0
        %1837 = vmatprep.subr.bf16.mxu0 0
        %1838 = vmatpush1.bf16.xpose.msra.mxu0 0
        %1839 = vmatprep.subr.bf16.mxu0 0
        %1840 = vmatpush1.bf16.xpose.msra.mxu0 0
        %1841 = vmatprep.subr.bf16.mxu0 0
        %1842 = vmatpush1.bf16.xpose.msra.mxu0 0
        %1843 = vmatprep.subr.bf16.mxu0 0
        %1844 = vmatpush1.bf16.xpose.msra.mxu0 0
        %1845 = vmatprep.subr.bf16.mxu0 0
        %1846 = vmatpush1.bf16.xpose.msra.mxu0 0
        %1847 = vmatprep.subr.bf16.mxu0 0
        %1848 = vmatpush1.bf16.xpose.msra.mxu0 0
        %1849 = vmatprep.subr.bf16.mxu0 0
        %1850 = vmatpush1.bf16.xpose.msra.mxu0 0
        %1851 = vmatprep.subr.bf16.mxu0 0
        %1852 = vmatpush1.bf16.xpose.msra.mxu0 0
        %1853 = vmatprep.subr.bf16.mxu0 0
        %1854 = vmatpush1.bf16.xpose.msra.mxu0 0
        %1855 = vmatprep.subr.bf16.mxu0 0
        %1856 = vmatpush1.bf16.xpose.msra.mxu0 0
        %1857 = vmatprep.subr.bf16.mxu0 0
        %1858 = vmatpush1.bf16.xpose.msra.mxu0 0
        %1859 = vmatprep.subr.bf16.mxu0 0
        %1860 = vmatpush1.bf16.xpose.msra.mxu0 0
        %1861 = vmatprep.subr.bf16.mxu0 0
        %1862 = vmatpush1.bf16.xpose.msra.mxu0 0
        %1863 = vmatprep.mubr.bf16.mxu0 0
        %1864 = vmatmul.mubr.bf16.gmra.mrb[0].mxu0 %v1826
        %v1865 = vpop.f32.mrb[0].mxu0
        %v1866 = vadd.f32 0.0, %v1865
        %v1867 = vpop.f32.mrb[0].mxu0
        %v1868 = vpop.f32.mrb[0].mxu0
        %v1869 = vadd.f32 0.0, %v1868
        %v1870 = vpop.f32.mrb[0].mxu0
        %1871 = vdwg.mxu0
        %v1872 = vmul.f32 %v1725, 0.35355338
        %v1873 = vmul.f32 %v1728, 0.35355338
        %v1874 = vmul.f32 %v1772, 0.35355338
        %v1875 = vmul.f32 %v1775, 0.35355338
        %v1876 = vmul.f32 %v1819, 0.35355338
        %v1877 = vmul.f32 %v1822, 0.35355338
        %v1878 = vmul.f32 %v1866, 0.35355338
        %v1879 = vmul.f32 %v1869, 0.35355338
        %v1881 = vlaneseq
        %v1882 = vshrl.u32 %v1881, 7
        %v1883 = vsub.s32 0, %v1882
        %v1884 = vrot.slane %v790, %v1883
        %v1886 = vadd.f32 %v1872, %v1884
        %v1887 = vadd.f32 %v1873, %v1884
        %v1888 = vadd.f32 %v1874, %v1884
        %v1889 = vadd.f32 %v1875, %v1884
        %v1890 = vadd.f32 %v1876, %v1884
        %v1891 = vadd.f32 %v1877, %v1884
        %v1892 = vadd.f32 %v1878, %v1884
        %v1893 = vadd.f32 %v1879, %v1884
        %vm1894 = vcmask 130048
        %v1895 = vsel %vm1894, %v1886, -inf
        %1896 = vmax.xlane.f32.xlu0 %v1895
        %v1897 = vpop.xlane.xlu0 %1896
        %v1898 = vsel %vm1894, %v1887, -inf
        %1899 = vmax.xlane.f32.xlu0 %v1898
        %v1900 = vpop.xlane.xlu0 %1899
        %v1901 = vsel %vm1894, %v1888, -inf
        %1902 = vmax.xlane.f32.xlu0 %v1901
        %v1903 = vpop.xlane.xlu0 %1902
        %v1904 = vsel %vm1894, %v1889, -inf
        %1905 = vmax.xlane.f32.xlu0 %v1904
        %v1906 = vpop.xlane.xlu0 %1905
        %v1907 = vsel %vm1894, %v1890, -inf
        %1908 = vmax.xlane.f32.xlu0 %v1907
        %v1909 = vpop.xlane.xlu0 %1908
        %v1910 = vsel %vm1894, %v1891, -inf
        %1911 = vmax.xlane.f32.xlu0 %v1910
        %v1912 = vpop.xlane.xlu0 %1911
        %v1913 = vsel %vm1894, %v1892, -inf
        %1914 = vmax.xlane.f32.xlu0 %v1913
        %v1915 = vpop.xlane.xlu0 %1914
        %v1916 = vsel %vm1894, %v1893, -inf
        %1917 = vmax.xlane.f32.xlu0 %v1916
        %v1918 = vpop.xlane.xlu0 %1917
        %v1919 = vsub.f32 %v1886, %v1897
        %v1920 = vsub.f32 %v1887, %v1900
        %v1921 = vsub.f32 %v1888, %v1903
        %v1922 = vsub.f32 %v1889, %v1906
        %v1923 = vsub.f32 %v1890, %v1909
        %v1924 = vsub.f32 %v1891, %v1912
        %v1925 = vsub.f32 %v1892, %v1915
        %v1926 = vsub.f32 %v1893, %v1918
        %v1927 = vmul.f32 %v1919, 1.442695
        %v1928 = vpow.pop %v1927
        %v1929 = vmul.f32 %v1920, 1.442695
        %v1930 = vpow.pop %v1929
        %v1931 = vmul.f32 %v1921, 1.442695
        %v1932 = vpow.pop %v1931
        %v1933 = vmul.f32 %v1922, 1.442695
        %v1934 = vpow.pop %v1933
        %v1935 = vmul.f32 %v1923, 1.442695
        %v1936 = vpow.pop %v1935
        %v1937 = vmul.f32 %v1924, 1.442695
        %v1938 = vpow.pop %v1937
        %v1939 = vmul.f32 %v1925, 1.442695
        %v1940 = vpow.pop %v1939
        %v1941 = vmul.f32 %v1926, 1.442695
        %v1942 = vpow.pop %v1941
        %v1943 = vsel %vm1894, %v1928, 0.0
        %1944 = vadd.xlane.f32.xlu0 %v1943
        %v1945 = vpop.xlane.xlu0 %1944
        %v1946 = vsel %vm1894, %v1930, 0.0
        %1947 = vadd.xlane.f32.xlu0 %v1946
        %v1948 = vpop.xlane.xlu0 %1947
        %v1949 = vsel %vm1894, %v1932, 0.0
        %1950 = vadd.xlane.f32.xlu0 %v1949
        %v1951 = vpop.xlane.xlu0 %1950
        %v1952 = vsel %vm1894, %v1934, 0.0
        %1953 = vadd.xlane.f32.xlu0 %v1952
        %v1954 = vpop.xlane.xlu0 %1953
        %v1955 = vsel %vm1894, %v1936, 0.0
        %1956 = vadd.xlane.f32.xlu0 %v1955
        %v1957 = vpop.xlane.xlu0 %1956
        %v1958 = vsel %vm1894, %v1938, 0.0
        %1959 = vadd.xlane.f32.xlu0 %v1958
        %v1960 = vpop.xlane.xlu0 %1959
        %v1961 = vsel %vm1894, %v1940, 0.0
        %1962 = vadd.xlane.f32.xlu0 %v1961
        %v1963 = vpop.xlane.xlu0 %1962
        %v1964 = vsel %vm1894, %v1942, 0.0
        %1965 = vadd.xlane.f32.xlu0 %v1964
        %v1966 = vpop.xlane.xlu0 %1965
        %v1967 = vrcp.pop %v1945
        %v1968 = vrcp.pop %v1948
        %v1969 = vrcp.pop %v1951
        %v1970 = vrcp.pop %v1954
        %v1971 = vrcp.pop %v1957
        %v1972 = vrcp.pop %v1960
        %v1973 = vrcp.pop %v1963
        %v1974 = vrcp.pop %v1966
        %v1975 = vmul.f32 %v1928, %v1967
        %v1976 = vmul.f32 %v1930, %v1968
        %v1977 = vmul.f32 %v1932, %v1969
        %v1978 = vmul.f32 %v1934, %v1970
        %v1979 = vmul.f32 %v1936, %v1971
        %v1980 = vmul.f32 %v1938, %v1972
        %v1981 = vmul.f32 %v1940, %v1973
        %v1982 = vmul.f32 %v1942, %v1974
        %v1983 = vpack.c.bf16 %v1976, %v1975
        %v1984 = vpack.c.bf16 %v1978, %v1977
        %v1985 = vpack.c.bf16 %v1980, %v1979
        %v1986 = vpack.c.bf16 %v1982, %v1981
        %v1987 = vpack.c.bf16 %v1671, %v1603
        %v1988 = vpack.c.bf16 %v1672, %v1604
        %v1989 = vpack.c.bf16 %v1673, %v1605
        %v1990 = vpack.c.bf16 %v1674, %v1606
        %v1992 = vsel %vm1894, %v1983, 0
        %1994 = vmatprep.subr.bf16.mxu0 0
        %1995 = vmatpush1.bf16.msra.mxu0 %v1987
        %1996 = vmatprep.subr.bf16.mxu0 0
        %1997 = vmatpush1.bf16.msra.mxu0 0
        %1998 = vmatprep.subr.bf16.mxu0 0
        %1999 = vmatpush1.bf16.msra.mxu0 0
        %2000 = vmatprep.subr.bf16.mxu0 0
        %2001 = vmatpush1.bf16.msra.mxu0 0
        %2002 = vmatprep.subr.bf16.mxu0 0
        %2003 = vmatpush1.bf16.msra.mxu0 0
        %2004 = vmatprep.subr.bf16.mxu0 0
        %2005 = vmatpush1.bf16.msra.mxu0 0
        %2006 = vmatprep.subr.bf16.mxu0 0
        %2007 = vmatpush1.bf16.msra.mxu0 0
        %2008 = vmatprep.subr.bf16.mxu0 0
        %2009 = vmatpush1.bf16.msra.mxu0 0
        %2010 = vmatprep.subr.bf16.mxu0 0
        %2011 = vmatpush1.bf16.msra.mxu0 0
        %2012 = vmatprep.subr.bf16.mxu0 0
        %2013 = vmatpush1.bf16.msra.mxu0 0
        %2014 = vmatprep.subr.bf16.mxu0 0
        %2015 = vmatpush1.bf16.msra.mxu0 0
        %2016 = vmatprep.subr.bf16.mxu0 0
        %2017 = vmatpush1.bf16.msra.mxu0 0
        %2018 = vmatprep.subr.bf16.mxu0 0
        %2019 = vmatpush1.bf16.msra.mxu0 0
        %2020 = vmatprep.subr.bf16.mxu0 0
        %2021 = vmatpush1.bf16.msra.mxu0 0
        %2022 = vmatprep.subr.bf16.mxu0 0
        %2023 = vmatpush1.bf16.msra.mxu0 0
        %2024 = vmatprep.subr.bf16.mxu0 0
        %2025 = vmatpush1.bf16.msra.mxu0 0
        %2026 = vmatprep.mubr.bf16.mxu0 0
        %2027 = vmatmul.mubr.bf16.gmra.mrb[0].mxu0 %v1992
        %v2028 = vpop.f32.mrb[0].mxu0
        %v2029 = vadd.f32 0.0, %v2028
        %v2030 = vpop.f32.mrb[0].mxu0
        %v2031 = vpop.f32.mrb[0].mxu0
        %v2032 = vadd.f32 0.0, %v2031
        %v2033 = vpop.f32.mrb[0].mxu0
        %2034 = vdwg.mxu0
        %v2036 = vsel %vm1894, %v1984, 0
        %2038 = vmatprep.subr.bf16.mxu0 0
        %2039 = vmatpush1.bf16.msra.mxu0 %v1988
        %2040 = vmatprep.subr.bf16.mxu0 0
        %2041 = vmatpush1.bf16.msra.mxu0 0
        %2042 = vmatprep.subr.bf16.mxu0 0
        %2043 = vmatpush1.bf16.msra.mxu0 0
        %2044 = vmatprep.subr.bf16.mxu0 0
        %2045 = vmatpush1.bf16.msra.mxu0 0
        %2046 = vmatprep.subr.bf16.mxu0 0
        %2047 = vmatpush1.bf16.msra.mxu0 0
        %2048 = vmatprep.subr.bf16.mxu0 0
        %2049 = vmatpush1.bf16.msra.mxu0 0
        %2050 = vmatprep.subr.bf16.mxu0 0
        %2051 = vmatpush1.bf16.msra.mxu0 0
        %2052 = vmatprep.subr.bf16.mxu0 0
        %2053 = vmatpush1.bf16.msra.mxu0 0
        %2054 = vmatprep.subr.bf16.mxu0 0
        %2055 = vmatpush1.bf16.msra.mxu0 0
        %2056 = vmatprep.subr.bf16.mxu0 0
        %2057 = vmatpush1.bf16.msra.mxu0 0
        %2058 = vmatprep.subr.bf16.mxu0 0
        %2059 = vmatpush1.bf16.msra.mxu0 0
        %2060 = vmatprep.subr.bf16.mxu0 0
        %2061 = vmatpush1.bf16.msra.mxu0 0
        %2062 = vmatprep.subr.bf16.mxu0 0
        %2063 = vmatpush1.bf16.msra.mxu0 0
        %2064 = vmatprep.subr.bf16.mxu0 0
        %2065 = vmatpush1.bf16.msra.mxu0 0
        %2066 = vmatprep.subr.bf16.mxu0 0
        %2067 = vmatpush1.bf16.msra.mxu0 0
        %2068 = vmatprep.subr.bf16.mxu0 0
        %2069 = vmatpush1.bf16.msra.mxu0 0
        %2070 = vmatprep.mubr.bf16.mxu0 0
        %2071 = vmatmul.mubr.bf16.gmra.mrb[0].mxu0 %v2036
        %v2072 = vpop.f32.mrb[0].mxu0
        %v2073 = vadd.f32 0.0, %v2072
        %v2074 = vpop.f32.mrb[0].mxu0
        %v2075 = vpop.f32.mrb[0].mxu0
        %v2076 = vadd.f32 0.0, %v2075
        %v2077 = vpop.f32.mrb[0].mxu0
        %2078 = vdwg.mxu0
        %v2080 = vsel %vm1894, %v1985, 0
        %2082 = vmatprep.subr.bf16.mxu0 0
        %2083 = vmatpush1.bf16.msra.mxu0 %v1989
        %2084 = vmatprep.subr.bf16.mxu0 0
        %2085 = vmatpush1.bf16.msra.mxu0 0
        %2086 = vmatprep.subr.bf16.mxu0 0
        %2087 = vmatpush1.bf16.msra.mxu0 0
        %2088 = vmatprep.subr.bf16.mxu0 0
        %2089 = vmatpush1.bf16.msra.mxu0 0
        %2090 = vmatprep.subr.bf16.mxu0 0
        %2091 = vmatpush1.bf16.msra.mxu0 0
        %2092 = vmatprep.subr.bf16.mxu0 0
        %2093 = vmatpush1.bf16.msra.mxu0 0
        %2094 = vmatprep.subr.bf16.mxu0 0
        %2095 = vmatpush1.bf16.msra.mxu0 0
        %2096 = vmatprep.subr.bf16.mxu0 0
        %2097 = vmatpush1.bf16.msra.mxu0 0
        %2098 = vmatprep.subr.bf16.mxu0 0
        %2099 = vmatpush1.bf16.msra.mxu0 0
        %2100 = vmatprep.subr.bf16.mxu0 0
        %2101 = vmatpush1.bf16.msra.mxu0 0
        %2102 = vmatprep.subr.bf16.mxu0 0
        %2103 = vmatpush1.bf16.msra.mxu0 0
        %2104 = vmatprep.subr.bf16.mxu0 0
        %2105 = vmatpush1.bf16.msra.mxu0 0
        %2106 = vmatprep.subr.bf16.mxu0 0
        %2107 = vmatpush1.bf16.msra.mxu0 0
        %2108 = vmatprep.subr.bf16.mxu0 0
        %2109 = vmatpush1.bf16.msra.mxu0 0
        %2110 = vmatprep.subr.bf16.mxu0 0
        %2111 = vmatpush1.bf16.msra.mxu0 0
        %2112 = vmatprep.subr.bf16.mxu0 0
        %2113 = vmatpush1.bf16.msra.mxu0 0
        %2114 = vmatprep.mubr.bf16.mxu0 0
        %2115 = vmatmul.mubr.bf16.gmra.mrb[0].mxu0 %v2080
        %v2116 = vpop.f32.mrb[0].mxu0
        %v2117 = vadd.f32 0.0, %v2116
        %v2118 = vpop.f32.mrb[0].mxu0
        %v2119 = vpop.f32.mrb[0].mxu0
        %v2120 = vadd.f32 0.0, %v2119
        %v2121 = vpop.f32.mrb[0].mxu0
        %2122 = vdwg.mxu0
        %v2124 = vsel %vm1894, %v1986, 0
        %2126 = vmatprep.subr.bf16.mxu0 0
        %2127 = vmatpush1.bf16.msra.mxu0 %v1990
        %2128 = vmatprep.subr.bf16.mxu0 0
        %2129 = vmatpush1.bf16.msra.mxu0 0
        %2130 = vmatprep.subr.bf16.mxu0 0
        %2131 = vmatpush1.bf16.msra.mxu0 0
        %2132 = vmatprep.subr.bf16.mxu0 0
        %2133 = vmatpush1.bf16.msra.mxu0 0
        %2134 = vmatprep.subr.bf16.mxu0 0
        %2135 = vmatpush1.bf16.msra.mxu0 0
        %2136 = vmatprep.subr.bf16.mxu0 0
        %2137 = vmatpush1.bf16.msra.mxu0 0
        %2138 = vmatprep.subr.bf16.mxu0 0
        %2139 = vmatpush1.bf16.msra.mxu0 0
        %2140 = vmatprep.subr.bf16.mxu0 0
        %2141 = vmatpush1.bf16.msra.mxu0 0
        %2142 = vmatprep.subr.bf16.mxu0 0
        %2143 = vmatpush1.bf16.msra.mxu0 0
        %2144 = vmatprep.subr.bf16.mxu0 0
        %2145 = vmatpush1.bf16.msra.mxu0 0
        %2146 = vmatprep.subr.bf16.mxu0 0
        %2147 = vmatpush1.bf16.msra.mxu0 0
        %2148 = vmatprep.subr.bf16.mxu0 0
        %2149 = vmatpush1.bf16.msra.mxu0 0
        %2150 = vmatprep.subr.bf16.mxu0 0
        %2151 = vmatpush1.bf16.msra.mxu0 0
        %2152 = vmatprep.subr.bf16.mxu0 0
        %2153 = vmatpush1.bf16.msra.mxu0 0
        %2154 = vmatprep.subr.bf16.mxu0 0
        %2155 = vmatpush1.bf16.msra.mxu0 0
        %2156 = vmatprep.subr.bf16.mxu0 0
        %2157 = vmatpush1.bf16.msra.mxu0 0
        %2158 = vmatprep.mubr.bf16.mxu0 0
        %2159 = vmatmul.mubr.bf16.gmra.mrb[0].mxu0 %v2124
        %v2160 = vpop.f32.mrb[0].mxu0
        %v2161 = vadd.f32 0.0, %v2160
        %v2162 = vpop.f32.mrb[0].mxu0
        %v2163 = vpop.f32.mrb[0].mxu0
        %v2164 = vadd.f32 0.0, %v2163
        %v2165 = vpop.f32.mrb[0].mxu0
        %2166 = vdwg.mxu0
        %v2167 = vcombine.low %v2029, %v2117
        %v2168 = vcombine.high %v2029, %v2117
        %v2170 = vunpack.c.l.s4 1983009808
        %v2171 = vunpack.c.0.s8 %v2170
        %v2172 = vlaneseq
        %v2173 = vshrl.u32 %v2172, 7
        %v2174 = vsub.s32 %v2171, %v2173
        %v2175 = vrot.slane %v2167, %v2174
        %v2177 = vunpack.c.l.s4 1983009808
        %v2178 = vunpack.c.0.s8 %v2177
        %v2179 = vlaneseq
        %v2180 = vshrl.u32 %v2179, 7
        %v2181 = vsub.s32 %v2178, %v2180
        %v2182 = vrot.slane %v2168, %v2181
        %v2183 = vcombine.low %v2073, %v2161
        %v2184 = vcombine.high %v2073, %v2161
        %v2186 = vunpack.c.l.s4 1983009808
        %v2187 = vunpack.c.0.s8 %v2186
        %v2188 = vlaneseq
        %v2189 = vshrl.u32 %v2188, 7
        %v2190 = vsub.s32 %v2187, %v2189
        %v2191 = vrot.slane %v2183, %v2190
        %v2193 = vunpack.c.l.s4 1983009808
        %v2194 = vunpack.c.0.s8 %v2193
        %v2195 = vlaneseq
        %v2196 = vshrl.u32 %v2195, 7
        %v2197 = vsub.s32 %v2194, %v2196
        %v2198 = vrot.slane %v2184, %v2197
        %v2199 = vcombine.low %v2175, %v2191
        %v2200 = vcombine.high %v2175, %v2191
        %v2202 = vunpack.c.l.s4 1934713408
        %v2203 = vunpack.c.0.s8 %v2202
        %v2204 = vlaneseq
        %v2205 = vshrl.u32 %v2204, 7
        %v2206 = vsub.s32 %v2203, %v2205
        %v2207 = vrot.slane %v2199, %v2206
        %v2209 = vunpack.c.l.s4 1934713408
        %v2210 = vunpack.c.0.s8 %v2209
        %v2211 = vlaneseq
        %v2212 = vshrl.u32 %v2211, 7
        %v2213 = vsub.s32 %v2210, %v2212
        %v2214 = vrot.slane %v2200, %v2213
        %v2215 = vcombine.low %v2182, %v2198
        %v2216 = vcombine.high %v2182, %v2198
        %v2218 = vunpack.c.l.s4 1934713408
        %v2219 = vunpack.c.0.s8 %v2218
        %v2220 = vlaneseq
        %v2221 = vshrl.u32 %v2220, 7
        %v2222 = vsub.s32 %v2219, %v2221
        %v2223 = vrot.slane %v2215, %v2222
        %v2225 = vunpack.c.l.s4 1934713408
        %v2226 = vunpack.c.0.s8 %v2225
        %v2227 = vlaneseq
        %v2228 = vshrl.u32 %v2227, 7
        %v2229 = vsub.s32 %v2226, %v2228
        %v2230 = vrot.slane %v2216, %v2229
        %v2231 = vcombine.high %v2207, 0.0
        %v2232 = vcombine.high %v2214, 0.0
        %v2233 = vcombine.high %v2223, 0.0
        %v2234 = vcombine.high %v2230, 0.0
        %v2235 = vcombine.low %v2032, %v2120
        %v2236 = vcombine.high %v2032, %v2120
        %v2238 = vunpack.c.l.s4 1983009808
        %v2239 = vunpack.c.0.s8 %v2238
        %v2240 = vlaneseq
        %v2241 = vshrl.u32 %v2240, 7
        %v2242 = vsub.s32 %v2239, %v2241
        %v2243 = vrot.slane %v2235, %v2242
        %v2245 = vunpack.c.l.s4 1983009808
        %v2246 = vunpack.c.0.s8 %v2245
        %v2247 = vlaneseq
        %v2248 = vshrl.u32 %v2247, 7
        %v2249 = vsub.s32 %v2246, %v2248
        %v2250 = vrot.slane %v2236, %v2249
        %v2251 = vcombine.low %v2076, %v2164
        %v2252 = vcombine.high %v2076, %v2164
        %v2254 = vunpack.c.l.s4 1983009808
        %v2255 = vunpack.c.0.s8 %v2254
        %v2256 = vlaneseq
        %v2257 = vshrl.u32 %v2256, 7
        %v2258 = vsub.s32 %v2255, %v2257
        %v2259 = vrot.slane %v2251, %v2258
        %v2261 = vunpack.c.l.s4 1983009808
        %v2262 = vunpack.c.0.s8 %v2261
        %v2263 = vlaneseq
        %v2264 = vshrl.u32 %v2263, 7
        %v2265 = vsub.s32 %v2262, %v2264
        %v2266 = vrot.slane %v2252, %v2265
        %v2267 = vcombine.low %v2243, %v2259
        %v2268 = vcombine.high %v2243, %v2259
        %v2270 = vunpack.c.l.s4 1934713408
        %v2271 = vunpack.c.0.s8 %v2270
        %v2272 = vlaneseq
        %v2273 = vshrl.u32 %v2272, 7
        %v2274 = vsub.s32 %v2271, %v2273
        %v2275 = vrot.slane %v2267, %v2274
        %v2277 = vunpack.c.l.s4 1934713408
        %v2278 = vunpack.c.0.s8 %v2277
        %v2279 = vlaneseq
        %v2280 = vshrl.u32 %v2279, 7
        %v2281 = vsub.s32 %v2278, %v2280
        %v2282 = vrot.slane %v2268, %v2281
        %v2283 = vcombine.low %v2250, %v2266
        %v2284 = vcombine.high %v2250, %v2266
        %v2286 = vunpack.c.l.s4 1934713408
        %v2287 = vunpack.c.0.s8 %v2286
        %v2288 = vlaneseq
        %v2289 = vshrl.u32 %v2288, 7
        %v2290 = vsub.s32 %v2287, %v2289
        %v2291 = vrot.slane %v2283, %v2290
        %v2293 = vunpack.c.l.s4 1934713408
        %v2294 = vunpack.c.0.s8 %v2293
        %v2295 = vlaneseq
        %v2296 = vshrl.u32 %v2295, 7
        %v2297 = vsub.s32 %v2294, %v2296
        %v2298 = vrot.slane %v2284, %v2297
        %v2299 = vcombine.high %v2275, 0.0
        %v2300 = vcombine.high %v2282, 0.0
        %v2301 = vcombine.high %v2291, 0.0
        %v2302 = vcombine.high %v2298, 0.0
        %v2303 = vcombine.low %v2207, %v2214
        %v2305 = vunpack.c.l.s4 1983009808
        %v2306 = vunpack.c.0.s8 %v2305
        %v2307 = vlaneseq
        %v2308 = vshrl.u32 %v2307, 7
        %v2309 = vsub.s32 %v2306, %v2308
        %v2310 = vrot.slane %v2303, %v2309
        %v2311 = vcombine.low %v2231, %v2232
        %v2313 = vunpack.c.l.s4 1983009808
        %v2314 = vunpack.c.0.s8 %v2313
        %v2315 = vlaneseq
        %v2316 = vshrl.u32 %v2315, 7
        %v2317 = vsub.s32 %v2314, %v2316
        %v2318 = vrot.slane %v2311, %v2317
        %v2319 = vcombine.low %v2223, %v2230
        %v2321 = vunpack.c.l.s4 1983009808
        %v2322 = vunpack.c.0.s8 %v2321
        %v2323 = vlaneseq
        %v2324 = vshrl.u32 %v2323, 7
        %v2325 = vsub.s32 %v2322, %v2324
        %v2326 = vrot.slane %v2319, %v2325
        %v2327 = vcombine.low %v2233, %v2234
        %v2329 = vunpack.c.l.s4 1983009808
        %v2330 = vunpack.c.0.s8 %v2329
        %v2331 = vlaneseq
        %v2332 = vshrl.u32 %v2331, 7
        %v2333 = vsub.s32 %v2330, %v2332
        %v2334 = vrot.slane %v2327, %v2333
        %v2335 = vcombine.low %v2310, %v2318
        %v2336 = vcombine.high %v2310, %v2318
        %v2338 = vunpack.c.l.s4 1934713408
        %v2339 = vunpack.c.0.s8 %v2338
        %v2340 = vlaneseq
        %v2341 = vshrl.u32 %v2340, 7
        %v2342 = vsub.s32 %v2339, %v2341
        %v2343 = vrot.slane %v2335, %v2342
        %v2345 = vunpack.c.l.s4 1934713408
        %v2346 = vunpack.c.0.s8 %v2345
        %v2347 = vlaneseq
        %v2348 = vshrl.u32 %v2347, 7
        %v2349 = vsub.s32 %v2346, %v2348
        %v2350 = vrot.slane %v2336, %v2349
        %v2351 = vcombine.low %v2326, %v2334
        %v2352 = vcombine.high %v2326, %v2334
        %v2354 = vunpack.c.l.s4 1934713408
        %v2355 = vunpack.c.0.s8 %v2354
        %v2356 = vlaneseq
        %v2357 = vshrl.u32 %v2356, 7
        %v2358 = vsub.s32 %v2355, %v2357
        %v2359 = vrot.slane %v2351, %v2358
        %v2361 = vunpack.c.l.s4 1934713408
        %v2362 = vunpack.c.0.s8 %v2361
        %v2363 = vlaneseq
        %v2364 = vshrl.u32 %v2363, 7
        %v2365 = vsub.s32 %v2362, %v2364
        %v2366 = vrot.slane %v2352, %v2365
        %v2367 = vcombine.low %v2343, %v2359
        %v2368 = vcombine.high %v2343, %v2359
        %v2369 = vcombine.low %v2350, %v2366
        %v2370 = vcombine.high %v2350, %v2366
        %v2371 = vcombine.low %v2275, %v2282
        %v2373 = vunpack.c.l.s4 1983009808
        %v2374 = vunpack.c.0.s8 %v2373
        %v2375 = vlaneseq
        %v2376 = vshrl.u32 %v2375, 7
        %v2377 = vsub.s32 %v2374, %v2376
        %v2378 = vrot.slane %v2371, %v2377
        %v2379 = vcombine.low %v2299, %v2300
        %v2381 = vunpack.c.l.s4 1983009808
        %v2382 = vunpack.c.0.s8 %v2381
        %v2383 = vlaneseq
        %v2384 = vshrl.u32 %v2383, 7
        %v2385 = vsub.s32 %v2382, %v2384
        %v2386 = vrot.slane %v2379, %v2385
        %v2387 = vcombine.low %v2291, %v2298
        %v2389 = vunpack.c.l.s4 1983009808
        %v2390 = vunpack.c.0.s8 %v2389
        %v2391 = vlaneseq
        %v2392 = vshrl.u32 %v2391, 7
        %v2393 = vsub.s32 %v2390, %v2392
        %v2394 = vrot.slane %v2387, %v2393
        %v2395 = vcombine.low %v2301, %v2302
        %v2397 = vunpack.c.l.s4 1983009808
        %v2398 = vunpack.c.0.s8 %v2397
        %v2399 = vlaneseq
        %v2400 = vshrl.u32 %v2399, 7
        %v2401 = vsub.s32 %v2398, %v2400
        %v2402 = vrot.slane %v2395, %v2401
        %v2403 = vcombine.low %v2378, %v2386
        %v2404 = vcombine.high %v2378, %v2386
        %v2406 = vunpack.c.l.s4 1934713408
        %v2407 = vunpack.c.0.s8 %v2406
        %v2408 = vlaneseq
        %v2409 = vshrl.u32 %v2408, 7
        %v2410 = vsub.s32 %v2407, %v2409
        %v2411 = vrot.slane %v2403, %v2410
        %v2413 = vunpack.c.l.s4 1934713408
        %v2414 = vunpack.c.0.s8 %v2413
        %v2415 = vlaneseq
        %v2416 = vshrl.u32 %v2415, 7
        %v2417 = vsub.s32 %v2414, %v2416
        %v2418 = vrot.slane %v2404, %v2417
        %v2419 = vcombine.low %v2394, %v2402
        %v2420 = vcombine.high %v2394, %v2402
        %v2422 = vunpack.c.l.s4 1934713408
        %v2423 = vunpack.c.0.s8 %v2422
        %v2424 = vlaneseq
        %v2425 = vshrl.u32 %v2424, 7
        %v2426 = vsub.s32 %v2423, %v2425
        %v2427 = vrot.slane %v2419, %v2426
        %v2429 = vunpack.c.l.s4 1934713408
        %v2430 = vunpack.c.0.s8 %v2429
        %v2431 = vlaneseq
        %v2432 = vshrl.u32 %v2431, 7
        %v2433 = vsub.s32 %v2430, %v2432
        %v2434 = vrot.slane %v2420, %v2433
        %v2435 = vcombine.low %v2411, %v2427
        %v2436 = vcombine.high %v2411, %v2427
        %v2437 = vcombine.low %v2418, %v2434
        %v2438 = vcombine.high %v2418, %v2434
        %2441 = vrot.lane.b32.xlu0 %v2368, 8
        %v2442 = vpop.permute.xlu0 %2441
        %2443 = vrot.lane.b32.xlu0 %v2436, 8
        %v2444 = vpop.permute.xlu0 %2443
        %2449 = vrot.lane.b32.xlu0 %v2369, 16
        %v2450 = vpop.permute.xlu0 %2449
        %2451 = vrot.lane.b32.xlu0 %v2437, 16
        %v2452 = vpop.permute.xlu0 %2451
        %2457 = vrot.lane.b32.xlu0 %v2370, 24
        %v2458 = vpop.permute.xlu0 %2457
        %2459 = vrot.lane.b32.xlu0 %v2438, 24
        %v2460 = vpop.permute.xlu0 %2459
        %v2463 = vsel %vm1683, %v2367, %v2442
        %v2464 = vsel %vm1683, %v2435, %v2444
        %v2465 = vsel %vm1894, %v2463, %v2450
        %v2466 = vsel %vm1894, %v2464, %v2452
        %vm2467 = vcmask 195584
        %v2468 = vsel %vm2467, %v2465, %v2458
        %v2469 = vsel %vm2467, %v2466, %v2460
        %v2470 = vpack.c.bf16 %v2469, %v2468
        %v2472 = vlaneseq
        %v2473 = vshrl.u32 %v2472, 7
        %v2474 = vsub.s32 0, %v2473
        %v2475 = vrot.slane %v789, %v2474
        %v2481 = vunpack.c.l.b16 %v785
        %v2482 = vunpack.c.l.b16 %v786
        %v2483 = vunpack.c.l.b16 %v787
        %v2484 = vunpack.c.l.b16 %v788
        %v2485 = vpack.c.b16 %v2482, %v2481
        %v2486 = vpack.c.b16 %v2484, %v2483
        %v2490 = vsel %vm740, %v2470, 0
        %2492 = vmatprep.subr.bf16.mxu0 0
        %2493 = vmatpush1.bf16.msra.mxu0 %v2485
        %2494 = vmatprep.subr.bf16.mxu0 0
        %2495 = vmatpush1.bf16.msra.mxu0 %v2486
        %2496 = vmatprep.subr.bf16.mxu0 0
        %2497 = vmatpush1.bf16.msra.mxu0 0
        %2498 = vmatprep.subr.bf16.mxu0 0
        %2499 = vmatpush1.bf16.msra.mxu0 0
        %2500 = vmatprep.subr.bf16.mxu0 0
        %2501 = vmatpush1.bf16.msra.mxu0 0
        %2502 = vmatprep.subr.bf16.mxu0 0
        %2503 = vmatpush1.bf16.msra.mxu0 0
        %2504 = vmatprep.subr.bf16.mxu0 0
        %2505 = vmatpush1.bf16.msra.mxu0 0
        %2506 = vmatprep.subr.bf16.mxu0 0
        %2507 = vmatpush1.bf16.msra.mxu0 0
        %2508 = vmatprep.subr.bf16.mxu0 0
        %2509 = vmatpush1.bf16.msra.mxu0 0
        %2510 = vmatprep.subr.bf16.mxu0 0
        %2511 = vmatpush1.bf16.msra.mxu0 0
        %2512 = vmatprep.subr.bf16.mxu0 0
        %2513 = vmatpush1.bf16.msra.mxu0 0
        %2514 = vmatprep.subr.bf16.mxu0 0
        %2515 = vmatpush1.bf16.msra.mxu0 0
        %2516 = vmatprep.subr.bf16.mxu0 0
        %2517 = vmatpush1.bf16.msra.mxu0 0
        %2518 = vmatprep.subr.bf16.mxu0 0
        %2519 = vmatpush1.bf16.msra.mxu0 0
        %2520 = vmatprep.subr.bf16.mxu0 0
        %2521 = vmatpush1.bf16.msra.mxu0 0
        %2522 = vmatprep.subr.bf16.mxu0 0
        %2523 = vmatpush1.bf16.msra.mxu0 0
        %2524 = vmatprep.mubr.bf16.mxu0 0
        %2525 = vmatmul.mubr.bf16.gmra.mrb[0].mxu0 %v2490
        %v2526 = vpop.f32.mrb[0].mxu0
        %v2527 = vadd.f32 %v2475, %v2526
        %v2528 = vpop.f32.mrb[0].mxu0
        %v2529 = vpop.f32.mrb[0].mxu0
        %v2530 = vadd.f32 %v2475, %v2529
        %v2531 = vpop.f32.mrb[0].mxu0
        %2532 = vdwg.mxu0
        %v2533 = vadd.f32 %v714, %v2527
        %v2534 = vadd.f32 %v715, %v2530
        %v2535 = vld [vmem:[%s678] sm:$0x1]
        %v2536 = vld [vmem:[%s681] sm:$0x1]
        %v2537 = vsel %vm740, %v2533, 0.0
        %2538 = vadd.xlane.f32.xlu0 %v2537
        %v2539 = vpop.xlane.xlu0 %2538
        %v2540 = vsel %vm740, %v2534, 0.0
        %2541 = vadd.xlane.f32.xlu0 %v2540
        %v2542 = vpop.xlane.xlu0 %2541
        %v2543 = vrcp.pop 32.0
        %v2544 = vmul.f32 %v2539, %v2543
        %v2545 = vmul.f32 %v2542, %v2543
        %v2546 = vsub.f32 %v2533, %v2544
        %v2547 = vsub.f32 %v2534, %v2545
        %v2548 = vmul.f32 %v2546, %v2546
        %v2549 = vmul.f32 %v2547, %v2547
        %v2550 = vsel %vm740, %v2548, 0.0
        %2551 = vadd.xlane.f32.xlu0 %v2550
        %v2552 = vpop.xlane.xlu0 %2551
        %v2553 = vsel %vm740, %v2549, 0.0
        %2554 = vadd.xlane.f32.xlu0 %v2553
        %v2555 = vpop.xlane.xlu0 %2554
        %v2556 = vmul.f32 %v2552, %v2543
        %v2557 = vmul.f32 %v2555, %v2543
        %v2558 = vadd.f32 %v2556, 1e-05
        %v2559 = vadd.f32 %v2557, 1e-05
        %v2560 = vrsqrt.pop %v2558
        %v2561 = vrsqrt.pop %v2559
        %v2562 = vmul.f32 %v2546, %v2560
        %v2563 = vmul.f32 %v2547, %v2561
        %v2565 = vlaneseq
        %v2566 = vshrl.u32 %v2565, 7
        %v2567 = vsub.s32 0, %v2566
        %v2568 = vrot.slane %v2535, %v2567
        %v2570 = vmul.f32 %v2562, %v2568
        %v2571 = vmul.f32 %v2563, %v2568
        %v2573 = vlaneseq
        %v2574 = vshrl.u32 %v2573, 7
        %v2575 = vsub.s32 0, %v2574
        %v2576 = vrot.slane %v2536, %v2575
        %v2578 = vadd.f32 %v2570, %v2576
        %v2579 = vadd.f32 %v2571, %v2576
        %v2580 = vld [vmem:[%s686] sm:$0xf]
        %v2581 = vld [vmem:[%s686 + $0x4] sm:$0xf]
        %v2582 = vld [vmem:[%s686 + $0x8] sm:$0xf]
        %v2583 = vld [vmem:[%s686 + $0xc] sm:$0xf]
        %v2584 = vld [vmem:[%s689] sm:$0x1]
        %v2585 = vpack.c.bf16 %v2579, %v2578
        %v2587 = vlaneseq
        %v2588 = vshrl.u32 %v2587, 7
        %v2589 = vsub.s32 0, %v2588
        %v2590 = vrot.slane %v2584, %v2589
        %v2596 = vunpack.c.l.b16 %v2580
        %v2597 = vunpack.c.l.b16 %v2581
        %v2598 = vunpack.c.l.b16 %v2582
        %v2599 = vunpack.c.l.b16 %v2583
        %v2600 = vpack.c.b16 %v2597, %v2596
        %v2601 = vpack.c.b16 %v2599, %v2598
        %v2605 = vsel %vm740, %v2585, 0
        %2607 = vmatprep.subr.bf16.mxu0 0
        %2608 = vmatpush1.bf16.msra.mxu0 %v2600
        %2609 = vmatprep.subr.bf16.mxu0 0
        %2610 = vmatpush1.bf16.msra.mxu0 %v2601
        %2611 = vmatprep.subr.bf16.mxu0 0
        %2612 = vmatpush1.bf16.msra.mxu0 0
        %2613 = vmatprep.subr.bf16.mxu0 0
        %2614 = vmatpush1.bf16.msra.mxu0 0
        %2615 = vmatprep.subr.bf16.mxu0 0
        %2616 = vmatpush1.bf16.msra.mxu0 0
        %2617 = vmatprep.subr.bf16.mxu0 0
        %2618 = vmatpush1.bf16.msra.mxu0 0
        %2619 = vmatprep.subr.bf16.mxu0 0
        %2620 = vmatpush1.bf16.msra.mxu0 0
        %2621 = vmatprep.subr.bf16.mxu0 0
        %2622 = vmatpush1.bf16.msra.mxu0 0
        %2623 = vmatprep.subr.bf16.mxu0 0
        %2624 = vmatpush1.bf16.msra.mxu0 0
        %2625 = vmatprep.subr.bf16.mxu0 0
        %2626 = vmatpush1.bf16.msra.mxu0 0
        %2627 = vmatprep.subr.bf16.mxu0 0
        %2628 = vmatpush1.bf16.msra.mxu0 0
        %2629 = vmatprep.subr.bf16.mxu0 0
        %2630 = vmatpush1.bf16.msra.mxu0 0
        %2631 = vmatprep.subr.bf16.mxu0 0
        %2632 = vmatpush1.bf16.msra.mxu0 0
        %2633 = vmatprep.subr.bf16.mxu0 0
        %2634 = vmatpush1.bf16.msra.mxu0 0
        %2635 = vmatprep.subr.bf16.mxu0 0
        %2636 = vmatpush1.bf16.msra.mxu0 0
        %2637 = vmatprep.subr.bf16.mxu0 0
        %2638 = vmatpush1.bf16.msra.mxu0 0
        %2639 = vmatprep.mubr.bf16.mxu0 0
        %2640 = vmatmul.mubr.bf16.gmra.mrb[0].mxu0 %v2605
        %v2641 = vpop.f32.mrb[0].mxu0
        %v2642 = vadd.f32 %v2590, %v2641
        %v2643 = vpop.f32.mrb[0].mxu0
        %v2644 = vpop.f32.mrb[0].mxu0
        %v2645 = vadd.f32 %v2590, %v2644
        %v2646 = vpop.f32.mrb[0].mxu0
        %2647 = vdwg.mxu0
        %v2648 = vmax.f32 %v2642, 0.0
        %v2649 = vmax.f32 %v2645, 0.0
        %v2650 = vld [vmem:[%s694] sm:$0xf]
        %v2651 = vld [vmem:[%s694 + $0x4] sm:$0xf]
        %v2652 = vld [vmem:[%s694 + $0x8] sm:$0xf]
        %v2653 = vld [vmem:[%s694 + $0xc] sm:$0xf]
        %v2654 = vld [vmem:[%s694 + $0x10] sm:$0xf]
        %v2655 = vld [vmem:[%s694 + $0x14] sm:$0xf]
        %v2656 = vld [vmem:[%s694 + $0x18] sm:$0xf]
        %v2657 = vld [vmem:[%s694 + $0x1c] sm:$0xf]
        %v2658 = vld [vmem:[%s697] sm:$0x1]
        %v2659 = vpack.c.bf16 %v2649, %v2648
        %v2661 = vlaneseq
        %v2662 = vshrl.u32 %v2661, 7
        %v2663 = vsub.s32 0, %v2662
        %v2664 = vrot.slane %v2658, %v2663
        %v2674 = vunpack.c.l.b16 %v2650
        %v2675 = vunpack.c.l.b16 %v2651
        %v2676 = vunpack.c.l.b16 %v2652
        %v2677 = vunpack.c.l.b16 %v2653
        %v2678 = vunpack.c.l.b16 %v2654
        %v2679 = vunpack.c.l.b16 %v2655
        %v2680 = vunpack.c.l.b16 %v2656
        %v2681 = vunpack.c.l.b16 %v2657
        %v2682 = vpack.c.b16 %v2675, %v2674
        %v2683 = vpack.c.b16 %v2677, %v2676
        %v2684 = vpack.c.b16 %v2679, %v2678
        %v2685 = vpack.c.b16 %v2681, %v2680
        %vm2690 = vcmask 523264
        %v2692 = vsel %vm2690, %v2659, 0
        %2694 = vmatprep.subr.bf16.mxu0 0
        %2695 = vmatpush1.bf16.msra.mxu0 %v2682
        %2696 = vmatprep.subr.bf16.mxu0 0
        %2697 = vmatpush1.bf16.msra.mxu0 %v2683
        %2698 = vmatprep.subr.bf16.mxu0 0
        %2699 = vmatpush1.bf16.msra.mxu0 %v2684
        %2700 = vmatprep.subr.bf16.mxu0 0
        %2701 = vmatpush1.bf16.msra.mxu0 %v2685
        %2702 = vmatprep.subr.bf16.mxu0 0
        %2703 = vmatpush1.bf16.msra.mxu0 0
        %2704 = vmatprep.subr.bf16.mxu0 0
        %2705 = vmatpush1.bf16.msra.mxu0 0
        %2706 = vmatprep.subr.bf16.mxu0 0
        %2707 = vmatpush1.bf16.msra.mxu0 0
        %2708 = vmatprep.subr.bf16.mxu0 0
        %2709 = vmatpush1.bf16.msra.mxu0 0
        %2710 = vmatprep.subr.bf16.mxu0 0
        %2711 = vmatpush1.bf16.msra.mxu0 0
        %2712 = vmatprep.subr.bf16.mxu0 0
        %2713 = vmatpush1.bf16.msra.mxu0 0
        %2714 = vmatprep.subr.bf16.mxu0 0
        %2715 = vmatpush1.bf16.msra.mxu0 0
        %2716 = vmatprep.subr.bf16.mxu0 0
        %2717 = vmatpush1.bf16.msra.mxu0 0
        %2718 = vmatprep.subr.bf16.mxu0 0
        %2719 = vmatpush1.bf16.msra.mxu0 0
        %2720 = vmatprep.subr.bf16.mxu0 0
        %2721 = vmatpush1.bf16.msra.mxu0 0
        %2722 = vmatprep.subr.bf16.mxu0 0
        %2723 = vmatpush1.bf16.msra.mxu0 0
        %2724 = vmatprep.subr.bf16.mxu0 0
        %2725 = vmatpush1.bf16.msra.mxu0 0
        %2726 = vmatprep.mubr.bf16.mxu0 0
        %2727 = vmatmul.mubr.bf16.gmra.mrb[0].mxu0 %v2692
        %v2728 = vpop.f32.mrb[0].mxu0
        %v2729 = vadd.f32 %v2664, %v2728
        %v2730 = vpop.f32.mrb[0].mxu0
        %v2731 = vpop.f32.mrb[0].mxu0
        %v2732 = vadd.f32 %v2664, %v2731
        %v2733 = vpop.f32.mrb[0].mxu0
        %2734 = vdwg.mxu0
        %v2735 = vadd.f32 %v2578, %v2729
        %v2736 = vadd.f32 %v2579, %v2732
        %v2737 = vld [vmem:[%s700] sm:$0x1]
        %v2738 = vld [vmem:[%s703] sm:$0x1]
        %v2739 = vsel %vm740, %v2735, 0.0
        %2740 = vadd.xlane.f32.xlu0 %v2739
        %v2741 = vpop.xlane.xlu0 %2740
        %v2742 = vsel %vm740, %v2736, 0.0
        %2743 = vadd.xlane.f32.xlu0 %v2742
        %v2744 = vpop.xlane.xlu0 %2743
        %v2745 = vmul.f32 %v2741, %v2543
        %v2746 = vmul.f32 %v2744, %v2543
        %v2747 = vsub.f32 %v2735, %v2745
        %v2748 = vsub.f32 %v2736, %v2746
        %v2749 = vmul.f32 %v2747, %v2747
        %v2750 = vmul.f32 %v2748, %v2748
        %v2751 = vsel %vm740, %v2749, 0.0
        %2752 = vadd.xlane.f32.xlu0 %v2751
        %v2753 = vpop.xlane.xlu0 %2752
        %v2754 = vsel %vm740, %v2750, 0.0
        %2755 = vadd.xlane.f32.xlu0 %v2754
        %v2756 = vpop.xlane.xlu0 %2755
        %v2757 = vmul.f32 %v2753, %v2543
        %v2758 = vmul.f32 %v2756, %v2543
        %v2759 = vadd.f32 %v2757, 1e-05
        %v2760 = vadd.f32 %v2758, 1e-05
        %v2761 = vrsqrt.pop %v2759
        %v2762 = vrsqrt.pop %v2760
        %v2763 = vmul.f32 %v2747, %v2761
        %v2764 = vmul.f32 %v2748, %v2762
        %v2766 = vlaneseq
        %v2767 = vshrl.u32 %v2766, 7
        %v2768 = vsub.s32 0, %v2767
        %v2769 = vrot.slane %v2737, %v2768
        %v2771 = vmul.f32 %v2763, %v2769
        %v2772 = vmul.f32 %v2764, %v2769
        %v2774 = vlaneseq
        %v2775 = vshrl.u32 %v2774, 7
        %v2776 = vsub.s32 0, %v2775
        %v2777 = vrot.slane %v2738, %v2776
        %v2779 = vadd.f32 %v2771, %v2777
        %v2780 = vadd.f32 %v2772, %v2777
        %2781 = vst.msk [vmem:[%s656] sm:$0xff] %vm740, %v2779
        %2782 = vst.msk [vmem:[%s656 + $0x8] sm:$0xff] %vm740, %v2780
        %s2783 = sand.u32 %s415, 1
        %s2784 = scalar_lea.sflag [#allocation4], %s2783
        %s2785 = sand.u32 %s415, 1
        %s2786 = smul.addr %s2785, 16
        %s2787 = scalar_lea.vmem [#allocation5], %s2786
        // Predicated region
        $region85: #{tpu_custom_call.1} parent=75 // pred_check
          %p2788 = pneg %p425
        $region86: #{tpu_custom_call.1} parent=75 // pred_check_branch
          %2790 = sbr.rel (%p2788) target = $region88
        $region87: #{tpu_custom_call.1} parent=75 // pred_region
          %s2792 = ssub.s32 256, 256
          %2793 = vsyncadd %s2784, %s2792
          %s2794 = smul.addr %s35, 2
          %s2795 = smul.addr %s2794, 128
          %s2796 = scalar_lea.hbm %s14, %s2795
          %s2797 = sshll.u32 %s2787, 4
          %s2798 = int_to_ptr.vmem [resolvable:$true] %s2797
          %2803 = dma.vmem_to_hbm [thread:$0]  %s2798, 256, %s2796, %s2784, 128, 128, 8
        $region88: #{tpu_custom_call.1} parent=75 // pred_fallthru
          _
      $region76: #{tpu_custom_call.1} parent=5 // pred_fallthru
        _
      %p2804 = scmp.le.s32.totalorder 2, %s26
      // Predicated region
      $region89: #{tpu_custom_call.1} parent=5 // pred_check
        %p2805 = pneg %p2804
      $region90: #{tpu_custom_call.1} parent=5 // pred_check_branch
        %2807 = sbr.rel (%p2805) target = $region92
      $region91: #{tpu_custom_call.1} parent=5 // pred_region
        %s2808 = ssub.s32 %s26, 2
        // Predicated region
        $region93: #{tpu_custom_call.1} parent=91 // pred_check
          %p2809 = pneg %p431
        $region94: #{tpu_custom_call.1} parent=91 // pred_check_branch
          %2811 = sbr.rel (%p2809) target = $region96
        $region95: #{tpu_custom_call.1} parent=91 // pred_region
          %s2812 = sand.u32 %s416, 1
          %s2813 = scalar_lea.sflag [#allocation4], %s2812
          %s2814 = sand.u32 %s416, 1
          %s2815 = smul.addr %s2814, 16
          %s2816 = scalar_lea.vmem [#allocation5], %s2815
          %2817 = dma.done %s2813, 256
        $region96: #{tpu_custom_call.1} parent=91 // pred_fallthru
          _
      $region92: #{tpu_custom_call.1} parent=5 // pred_fallthru
        _
    $region6: #{tpu_custom_call.1} parent=1 // loop_footer
      %s30 = sadd.s32 1, %s26
    $region7: #{tpu_custom_call.1} parent=1 // loop_footer_branch
      %25 = sbr.rel target = $region3
    $region8: #{tpu_custom_call.1} parent=1 // loop_exit
      _
    %2818 = vsyncpa [#allocation3], 1
    %s2819 = scalar_lea.sflag [#allocation3], 1
    %2820 = vsyncpa %s2819, 1
    %2821 = vsyncpa [#allocation4], 1
    %s2822 = scalar_lea.sflag [#allocation4], 1
    %2823 = vsyncpa %s2822, 1

</llo_original>
